<compile_context>
chip_gen: v7x
topology: tpu7x:2x2x1
jax: 0.10.0
libtpu: 0.0.40
codegen_flags: <defaults>
</compile_context>

<pallas_src>
import math
from functools import partial

import jax
import jax.numpy as jnp
from jax import lax
from jax.experimental import pallas as pl
from jax.experimental.pallas import tpu as pltpu


# -------------------- config (small, consistent with the module) --------------------
CFG = dict(
    emb_dim=32,
    n_heads=4,
    seq_len=8,
    batch=2,
    qkv_bias=False,
    drop_rate=0.0,
)


# -------------------------------- kernel helpers ------------------------------------
def _layernorm(x, scale, shift, eps=1e-7):
    # x: (N, D); scale/shift: (1, D).  All f32 (VPU/EUP math stays f32).
    mean = jnp.mean(x, axis=-1, keepdims=True)
    var = jnp.mean((x - mean) ** 2, axis=-1, keepdims=True)      # unbiased=False
    xn = (x - mean) * lax.rsqrt(var + eps)                       # rsqrt -> EUP slot
    return (xn + shift) * scale                                  # exact PyTorch order


def _gelu_tanh(x):
    c = math.sqrt(2.0 / math.pi)
    return 0.5 * x * (1.0 + jnp.tanh(c * (x + 0.044715 * x * x * x)))


# ---------------------------------- the kernel --------------------------------------
def transformer_block_kernel(
    x_ref,             # (Bblk, T, D) f32
    sc1_ref, sh1_ref,  # (1, D) f32    layernorm 1
    wqkv_ref,          # (D, 3D) bf16  fused q/k/v projection (no qkv bias)
    wo_ref,            # (H, hd, D) bf16  output projection, split by head rows
    bo_ref,            # (1, D) f32
    w1_ref, b1_ref,    # (D, 4D) bf16, (1, 4D) f32
    w2_ref, b2_ref,    # (4D, D) bf16, (1, D) f32
    sc2_ref, sh2_ref,  # (1, D) f32    layernorm 2
    o_ref,             # (Bblk, T, D) f32
    *, n_heads, seq_len, emb_dim,
):
    T, D, H = seq_len, emb_dim, n_heads
    hd = D // H
    Bblk = x_ref.shape[0]
    N = Bblk * T
    inv_sqrt_hd = jnp.float32(1.0 / math.sqrt(hd))
    neg_big = jnp.float32(jnp.finfo(jnp.float32).min / 2)   # finite "-inf"

    # Flatten batch into the matmul M dimension for the dense matmuls only.
    x = x_ref[...].reshape(N, D)

    # ---- norm1 (f32) ----
    h1 = _layernorm(x, sc1_ref[...], sh1_ref[...])

    # ---- fused QKV projection: one MXU push, bf16 operands, f32 accumulation ----
    qkv = jnp.dot(h1.astype(jnp.bfloat16), wqkv_ref[...],
                  preferred_element_type=jnp.float32)            # (N, 3D) f32

    # Additive causal bias over (T, T), built once outside both loops.
    row = lax.broadcasted_iota(jnp.int32, (T, T), 0)
    col = lax.broadcasted_iota(jnp.int32, (T, T), 1)
    causal_bias = jnp.where(row >= col, jnp.float32(0.0), neg_big)   # (T, T) f32

    # ---- multi-head self-attention, per batch (plain (T,T) scores) -----------------
    attn_blocks = []
    for b in range(Bblk):                       # static loop, Bblk is small
        r0, r1 = b * T, (b + 1) * T
        q_b = qkv[r0:r1, 0:D]
        k_b = qkv[r0:r1, D:2 * D]
        v_b = qkv[r0:r1, 2 * D:3 * D]

        acc = jnp.zeros((T, D), jnp.float32)    # lane-dense f32 accumulator
        for h in range(H):                      # static head loop
            c0, c1 = h * hd, (h + 1) * hd
            q_h = q_b[:, c0:c1].astype(jnp.bfloat16)   # (T, hd)
            k_h = k_b[:, c0:c1].astype(jnp.bfloat16)
            v_h = v_b[:, c0:c1].astype(jnp.bfloat16)

            # q @ k^T (contract hd), f32 accumulation, then scale + causal bias.
            s = lax.dot_general(q_h, k_h, (((1,), (1,)), ((), ())),
                                preferred_element_type=jnp.float32)   # (T, T)
            s = s * inv_sqrt_hd + causal_bias

            m = jnp.max(s, axis=-1, keepdims=True)
            e = jnp.exp(s - m)
            p = e * pl.reciprocal(jnp.sum(e, axis=-1, keepdims=True), approx=True)

            ctx = jnp.dot(p.astype(jnp.bfloat16), v_h,
                          preferred_element_type=jnp.float32)          # (T, hd)
            # Fold Wo: contract this head's context against its (hd, D) Wo slice.
            acc = acc + jnp.dot(ctx.astype(jnp.bfloat16), wo_ref[h],
                                preferred_element_type=jnp.float32)    # (T, D)
        attn_blocks.append(acc)

    attn = attn_blocks[0] if Bblk == 1 else jnp.concatenate(attn_blocks, axis=0)

    # residual 1 (dropout = identity); output-projection bias added once.
    x1 = attn + bo_ref[...] + x                                        # (N, D) f32

    # ---- norm2 + MLP ----
    h2 = _layernorm(x1, sc2_ref[...], sh2_ref[...])
    ff = jnp.dot(h2.astype(jnp.bfloat16), w1_ref[...],
                 preferred_element_type=jnp.float32) + b1_ref[...]
    ff = _gelu_tanh(ff)                                                # f32
    ff = jnp.dot(ff.astype(jnp.bfloat16), w2_ref[...],
                 preferred_element_type=jnp.float32) + b2_ref[...]

    # residual 2 (dropout = identity)
    o_ref[...] = (ff + x1).reshape(Bblk, T, D)


# ------------------------------ chip-aware grid choice -------------------------------
def _tensorcores_per_chip():
    """2 for megacore / dual-TC devices (v4/v5p/v7x), else 1 (v2/v3/v5e/v6e)."""
    try:
        kind = jax.devices()[0].device_kind.lower().replace(" ", "")
    except Exception:
        return 1
    return 2 if any(t in kind for t in ("v7", "7x", "v4", "v5p")) else 1


# --------------------------------- wrapper ------------------------------------------
def transformer_block(x, params, n_heads):
    B, T, D = x.shape
    D4 = 4 * D
    hd = D // n_heads

    # Fuse the three projection weights into one (D, 3D) matrix and cast all MXU
    # weight operands to bf16 once here (f32 accumulation happens in the kernel).
    wqkv = jnp.concatenate(
        [params["wq"], params["wk"], params["wv"]], axis=1).astype(jnp.bfloat16)
    wo = params["wo"].reshape(n_heads, hd, D).astype(jnp.bfloat16)
    w1 = params["w1"].astype(jnp.bfloat16)
    w2 = params["w2"].astype(jnp.bfloat16)

    # Single grid step on 1-TC chips (no per-step overhead, bigger matmul M);
    # keep a parallel batch axis on dual-TC chips so both cores get work.
    if _tensorcores_per_chip() > 1 and B > 1:
        bblk = 1
    else:
        bblk = B
    grid = (B // bblk,)

    full = lambda shp: pl.BlockSpec(shp, lambda b: (0,) * len(shp))
    in_specs = [
        pl.BlockSpec((bblk, T, D), lambda b: (b, 0, 0)),   # x
        full((1, D)), full((1, D)),                        # scale1, shift1
        full((D, 3 * D)),                                  # wqkv (bf16)
        full((n_heads, hd, D)), full((1, D)),              # wo (bf16), bo
        full((D, D4)), full((1, D4)),                      # w1 (bf16), b1
        full((D4, D)), full((1, D)),                       # w2 (bf16), b2
        full((1, D)), full((1, D)),                        # scale2, shift2
    ]
    out_spec = pl.BlockSpec((bblk, T, D), lambda b: (b, 0, 0))

    return pl.pallas_call(
        partial(transformer_block_kernel, n_heads=n_heads, seq_len=T, emb_dim=D),
        out_shape=jax.ShapeDtypeStruct((B, T, D), jnp.float32),
        grid_spec=pltpu.PrefetchScalarGridSpec(
            num_scalar_prefetch=0,
            grid=grid,
            in_specs=in_specs,
            out_specs=out_spec,
        ),
        compiler_params=pltpu.CompilerParams(
            dimension_semantics=("parallel",),
            vmem_limit_bytes=32 * 1024 * 1024),
    )(
        x,
        params["scale1"], params["shift1"],
        wqkv,
        wo, params["bo"],
        w1, params["b1"],
        w2, params["b2"],
        params["scale2"], params["shift2"],
    )


# ----------------------------- parameter construction -------------------------------
def init_params(key, D):
    D4 = 4 * D
    ks = jax.random.split(key, 8)
    std = 0.02
    # PyTorch Linear stores W as [out, in]; weights here are generated directly
    # in [in, out] so the kernel computes x @ W.
    return dict(
        scale1=jnp.ones((1, D), jnp.float32),
        shift1=jnp.zeros((1, D), jnp.float32),
        wq=std * jax.random.normal(ks[0], (D, D), jnp.float32),
        wk=std * jax.random.normal(ks[1], (D, D), jnp.float32),
        wv=std * jax.random.normal(ks[2], (D, D), jnp.float32),
        wo=std * jax.random.normal(ks[3], (D, D), jnp.float32),
        bo=jnp.zeros((1, D), jnp.float32),
        w1=std * jax.random.normal(ks[4], (D, D4), jnp.float32),
        b1=jnp.zeros((1, D4), jnp.float32),
        w2=std * jax.random.normal(ks[5], (D4, D), jnp.float32),
        b2=jnp.zeros((1, D), jnp.float32),
        scale2=jnp.ones((1, D), jnp.float32),
        shift2=jnp.zeros((1, D), jnp.float32),
    )


# ------------------------------ pure-JAX reference -----------------------------------
def reference_block(x, p, n_heads):
    def ln(x, s, sh):
        m = jnp.mean(x, -1, keepdims=True)
        v = jnp.mean((x - m) ** 2, -1, keepdims=True)
        return ((x - m) / jnp.sqrt(v + 1e-7) + sh) * s

    B, T, D = x.shape
    hd = D // n_heads
    h = ln(x, p["scale1"], p["shift1"])
    q = h @ p["wq"]; k = h @ p["wk"]; v = h @ p["wv"]
    q = q.reshape(B, T, n_heads, hd).transpose(0, 2, 1, 3)
    k = k.reshape(B, T, n_heads, hd).transpose(0, 2, 1, 3)
    v = v.reshape(B, T, n_heads, hd).transpose(0, 2, 1, 3)
    s = jnp.einsum("bhqd,bhkd->bhqk", q, k) / math.sqrt(hd)
    mask = jnp.tril(jnp.ones((T, T), bool))
    s = jnp.where(mask, s, -jnp.inf)
    pmat = jax.nn.softmax(s, axis=-1)
    a = jnp.einsum("bhqk,bhkd->bhqd", pmat, v).transpose(0, 2, 1, 3).reshape(B, T, D)
    a = a @ p["wo"] + p["bo"]
    x1 = a + x
    h2 = ln(x1, p["scale2"], p["shift2"])
    ff = h2 @ p["w1"] + p["b1"]
    c = math.sqrt(2.0 / math.pi)
    ff = 0.5 * ff * (1 + jnp.tanh(c * (ff + 0.044715 * ff ** 3)))
    ff = ff @ p["w2"] + p["b2"]
    return ff + x1


# --------------------------------------- main ---------------------------------------
if __name__ == "__main__":
    key = jax.random.PRNGKey(0)
    kx, kp = jax.random.split(key)

    B, T, D, H = CFG["batch"], CFG["seq_len"], CFG["emb_dim"], CFG["n_heads"]
    x = jax.random.normal(kx, (B, T, D), jnp.float32)
    params = init_params(kp, D)

    out = transformer_block(x, params, H)
    out = jax.block_until_ready(out)

    ref = reference_block(x, params, H)
    assert out.shape == (B, T, D)
    # Tolerance accounts for bf16 MXU operands (f32 accumulation) and the EUP
    # approx-reciprocal softmax denominator; observed error is well below this.
    assert jnp.allclose(out, ref, atol=1e-2, rtol=1e-2), (
        f"max abs diff {jnp.max(jnp.abs(out - ref))}")

    print("KERNEL_OK")
</pallas_src>

<mosaic_0001>
module attributes {stable_mosaic.version = 11 : i64} {
  func.func @transformer_block_kernel(%arg0: i32, %arg1: memref<2x8x32xf32, #tpu.memory_space<vmem>>, %arg2: memref<1x32xf32, #tpu.memory_space<vmem>>, %arg3: memref<1x32xf32, #tpu.memory_space<vmem>>, %arg4: memref<32x96xbf16, #tpu.memory_space<vmem>>, %arg5: memref<4x8x32xbf16, #tpu.memory_space<vmem>>, %arg6: memref<1x32xf32, #tpu.memory_space<vmem>>, %arg7: memref<32x128xbf16, #tpu.memory_space<vmem>>, %arg8: memref<1x128xf32, #tpu.memory_space<vmem>>, %arg9: memref<128x32xbf16, #tpu.memory_space<vmem>>, %arg10: memref<1x32xf32, #tpu.memory_space<vmem>>, %arg11: memref<1x32xf32, #tpu.memory_space<vmem>>, %arg12: memref<1x32xf32, #tpu.memory_space<vmem>>, %arg13: memref<2x8x32xf32, #tpu.memory_space<vmem>>) attributes {dimension_semantics = [#tpu.dimension_semantics<parallel>], iteration_bounds = array<i64: 1>, scalar_prefetch = 0 : i64, scratch_operands = 0 : i64, tpu.core_type = #tpu.core_type<tc>, window_params = [{transform_indices = @transform_0, window_bounds = array<i64: 2, 8, 32>}, {pipeline_mode = #tpu.pipeline_mode<synchronous>, transform_indices = @transform_1, window_bounds = array<i64: 1, 32>}, {pipeline_mode = #tpu.pipeline_mode<synchronous>, transform_indices = @transform_2, window_bounds = array<i64: 1, 32>}, {pipeline_mode = #tpu.pipeline_mode<synchronous>, transform_indices = @transform_3, window_bounds = array<i64: 32, 96>}, {pipeline_mode = #tpu.pipeline_mode<synchronous>, transform_indices = @transform_4, window_bounds = array<i64: 4, 8, 32>}, {pipeline_mode = #tpu.pipeline_mode<synchronous>, transform_indices = @transform_5, window_bounds = array<i64: 1, 32>}, {pipeline_mode = #tpu.pipeline_mode<synchronous>, transform_indices = @transform_6, window_bounds = array<i64: 32, 128>}, {pipeline_mode = #tpu.pipeline_mode<synchronous>, transform_indices = @transform_7, window_bounds = array<i64: 1, 128>}, {pipeline_mode = #tpu.pipeline_mode<synchronous>, transform_indices = @transform_8, window_bounds = array<i64: 128, 32>}, {pipeline_mode = #tpu.pipeline_mode<synchronous>, transform_indices = @transform_9, window_bounds = array<i64: 1, 32>}, {pipeline_mode = #tpu.pipeline_mode<synchronous>, transform_indices = @transform_10, window_bounds = array<i64: 1, 32>}, {pipeline_mode = #tpu.pipeline_mode<synchronous>, transform_indices = @transform_11, window_bounds = array<i64: 1, 32>}, {transform_indices = @transform_12, window_bounds = array<i64: 2, 8, 32>}]} {
    %c0 = arith.constant 0 : index
    %c0_0 = arith.constant 0 : index
    %c0_1 = arith.constant 0 : index
    %0 = vector.load %arg1[%c0, %c0_0, %c0_1] : memref<2x8x32xf32, #tpu.memory_space<vmem>>, vector<2x8x32xf32>
    %1 = vector.shape_cast %0 : vector<2x8x32xf32> to vector<16x32xf32>
    %c0_2 = arith.constant 0 : index
    %c0_3 = arith.constant 0 : index
    %2 = vector.load %arg2[%c0_2, %c0_3] : memref<1x32xf32, #tpu.memory_space<vmem>>, vector<1x32xf32>
    %c0_4 = arith.constant 0 : index
    %c0_5 = arith.constant 0 : index
    %3 = vector.load %arg3[%c0_4, %c0_5] : memref<1x32xf32, #tpu.memory_space<vmem>>, vector<1x32xf32>
    %cst = arith.constant dense<0.000000e+00> : vector<16xf32>
    %4 = vector.multi_reduction <add>, %1, %cst [1] : vector<16x32xf32> to vector<16xf32>
    %5 = vector.shape_cast %4 : vector<16xf32> to vector<16x1xf32>
    %cst_6 = arith.constant 3.200000e+01 : f32
    %6 = vector.broadcast %cst_6 : f32 to vector<16x1xf32>
    %7 = arith.divf %5, %6 : vector<16x1xf32>
    %8 = vector.broadcast %7 : vector<16x1xf32> to vector<16x32xf32>
    %9 = arith.subf %1, %8 : vector<16x32xf32>
    %10 = arith.mulf %9, %9 : vector<16x32xf32>
    %cst_7 = arith.constant dense<0.000000e+00> : vector<16xf32>
    %11 = vector.multi_reduction <add>, %10, %cst_7 [1] : vector<16x32xf32> to vector<16xf32>
    %12 = vector.shape_cast %11 : vector<16xf32> to vector<16x1xf32>
    %cst_8 = arith.constant 3.200000e+01 : f32
    %13 = vector.broadcast %cst_8 : f32 to vector<16x1xf32>
    %14 = arith.divf %12, %13 : vector<16x1xf32>
    %15 = vector.broadcast %7 : vector<16x1xf32> to vector<16x32xf32>
    %16 = arith.subf %1, %15 : vector<16x32xf32>
    %cst_9 = arith.constant 1.000000e-07 : f32
    %17 = vector.broadcast %cst_9 : f32 to vector<16x1xf32>
    %18 = arith.addf %14, %17 : vector<16x1xf32>
    %19 = math.rsqrt %18 : vector<16x1xf32>
    %20 = vector.broadcast %19 : vector<16x1xf32> to vector<16x32xf32>
    %21 = arith.mulf %16, %20 : vector<16x32xf32>
    %22 = vector.broadcast %3 : vector<1x32xf32> to vector<16x32xf32>
    %23 = arith.addf %21, %22 : vector<16x32xf32>
    %24 = vector.broadcast %2 : vector<1x32xf32> to vector<16x32xf32>
    %25 = arith.mulf %23, %24 : vector<16x32xf32>
    %26 = arith.truncf %25 : vector<16x32xf32> to vector<16x32xbf16>
    %c0_10 = arith.constant 0 : index
    %c0_11 = arith.constant 0 : index
    %27 = vector.load %arg4[%c0_10, %c0_11] : memref<32x96xbf16, #tpu.memory_space<vmem>>, vector<32x96xbf16>
    %cst_12 = arith.constant dense<0.000000e+00> : vector<16x96xf32>
    %28 = tpu.matmul %26, %27, %cst_12 {dimension_numbers = #tpu.dot_dimension_numbers<[1], [0], [0], [1], [0, 0, 1, 1], [], []>} : vector<16x32xbf16>, vector<32x96xbf16>, vector<16x96xf32> -> vector<16x96xf32>
    %29 = tpu.iota {dimensions = array<i32: 0>} : vector<8x8xi32>
    %30 = tpu.iota {dimensions = array<i32: 1>} : vector<8x8xi32>
    %31 = arith.cmpi sge, %29, %30 : vector<8x8xi32>
    %cst_13 = arith.constant 0.000000e+00 : f32
    %cst_14 = arith.constant -1.70141173E+38 : f32
    %32 = vector.broadcast %cst_13 : f32 to vector<8x8xf32>
    %33 = vector.broadcast %cst_14 : f32 to vector<8x8xf32>
    %34 = arith.select %31, %32, %33 : vector<8x8xi1>, vector<8x8xf32>
    %35 = vector.extract_strided_slice %28 {offsets = [0, 0], sizes = [8, 32], strides = [1, 1]} : vector<16x96xf32> to vector<8x32xf32>
    %36 = vector.extract_strided_slice %28 {offsets = [0, 32], sizes = [8, 32], strides = [1, 1]} : vector<16x96xf32> to vector<8x32xf32>
    %37 = vector.extract_strided_slice %28 {offsets = [0, 64], sizes = [8, 32], strides = [1, 1]} : vector<16x96xf32> to vector<8x32xf32>
    %cst_15 = arith.constant 0.000000e+00 : f32
    %38 = vector.broadcast %cst_15 : f32 to vector<8x32xf32>
    %39 = vector.extract_strided_slice %35 {offsets = [0, 0], sizes = [8, 8], strides = [1, 1]} : vector<8x32xf32> to vector<8x8xf32>
    %40 = arith.truncf %39 : vector<8x8xf32> to vector<8x8xbf16>
    %41 = vector.extract_strided_slice %36 {offsets = [0, 0], sizes = [8, 8], strides = [1, 1]} : vector<8x32xf32> to vector<8x8xf32>
    %42 = arith.truncf %41 : vector<8x8xf32> to vector<8x8xbf16>
    %43 = vector.extract_strided_slice %37 {offsets = [0, 0], sizes = [8, 8], strides = [1, 1]} : vector<8x32xf32> to vector<8x8xf32>
    %44 = arith.truncf %43 : vector<8x8xf32> to vector<8x8xbf16>
    %cst_16 = arith.constant dense<0.000000e+00> : vector<8x8xf32>
    %45 = tpu.matmul %40, %42, %cst_16 {dimension_numbers = #tpu.dot_dimension_numbers<[1], [1], [0], [0], [0, 0, 1, 0], [], []>} : vector<8x8xbf16>, vector<8x8xbf16>, vector<8x8xf32> -> vector<8x8xf32>
    %cst_17 = arith.constant 0.353553385 : f32
    %46 = vector.broadcast %cst_17 : f32 to vector<8x8xf32>
    %47 = arith.mulf %45, %46 : vector<8x8xf32>
    %48 = arith.addf %47, %34 : vector<8x8xf32>
    %cst_18 = arith.constant dense<0xFF800000> : vector<8xf32>
    %49 = vector.multi_reduction <maximumf>, %48, %cst_18 [1] : vector<8x8xf32> to vector<8xf32>
    %50 = vector.shape_cast %49 : vector<8xf32> to vector<8x1xf32>
    %51 = vector.broadcast %50 : vector<8x1xf32> to vector<8x8xf32>
    %52 = arith.subf %48, %51 : vector<8x8xf32>
    %53 = math.exp %52 : vector<8x8xf32>
    %cst_19 = arith.constant dense<0.000000e+00> : vector<8xf32>
    %54 = vector.multi_reduction <add>, %53, %cst_19 [1] : vector<8x8xf32> to vector<8xf32>
    %55 = vector.shape_cast %54 : vector<8xf32> to vector<8x1xf32>
    %56 = tpu.reciprocal %55 {approx = true} : vector<8x1xf32> -> vector<8x1xf32>
    %57 = vector.broadcast %56 : vector<8x1xf32> to vector<8x8xf32>
    %58 = arith.mulf %53, %57 : vector<8x8xf32>
    %59 = arith.truncf %58 : vector<8x8xf32> to vector<8x8xbf16>
    %cst_20 = arith.constant dense<0.000000e+00> : vector<8x8xf32>
    %60 = tpu.matmul %59, %44, %cst_20 {dimension_numbers = #tpu.dot_dimension_numbers<[1], [0], [0], [1], [0, 0, 1, 1], [], []>} : vector<8x8xbf16>, vector<8x8xbf16>, vector<8x8xf32> -> vector<8x8xf32>
    %61 = arith.truncf %60 : vector<8x8xf32> to vector<8x8xbf16>
    %c0_21 = arith.constant 0 : index
    %c0_22 = arith.constant 0 : index
    %c0_23 = arith.constant 0 : index
    %62 = vector.load %arg5[%c0_21, %c0_22, %c0_23] : memref<4x8x32xbf16, #tpu.memory_space<vmem>>, vector<1x8x32xbf16>
    %63 = vector.shape_cast %62 : vector<1x8x32xbf16> to vector<8x32xbf16>
    %cst_24 = arith.constant dense<0.000000e+00> : vector<8x32xf32>
    %64 = tpu.matmul %61, %63, %cst_24 {dimension_numbers = #tpu.dot_dimension_numbers<[1], [0], [0], [1], [0, 0, 1, 1], [], []>} : vector<8x8xbf16>, vector<8x32xbf16>, vector<8x32xf32> -> vector<8x32xf32>
    %65 = arith.addf %38, %64 : vector<8x32xf32>
    %66 = vector.extract_strided_slice %35 {offsets = [0, 8], sizes = [8, 8], strides = [1, 1]} : vector<8x32xf32> to vector<8x8xf32>
    %67 = arith.truncf %66 : vector<8x8xf32> to vector<8x8xbf16>
    %68 = vector.extract_strided_slice %36 {offsets = [0, 8], sizes = [8, 8], strides = [1, 1]} : vector<8x32xf32> to vector<8x8xf32>
    %69 = arith.truncf %68 : vector<8x8xf32> to vector<8x8xbf16>
    %70 = vector.extract_strided_slice %37 {offsets = [0, 8], sizes = [8, 8], strides = [1, 1]} : vector<8x32xf32> to vector<8x8xf32>
    %71 = arith.truncf %70 : vector<8x8xf32> to vector<8x8xbf16>
    %cst_25 = arith.constant dense<0.000000e+00> : vector<8x8xf32>
    %72 = tpu.matmul %67, %69, %cst_25 {dimension_numbers = #tpu.dot_dimension_numbers<[1], [1], [0], [0], [0, 0, 1, 0], [], []>} : vector<8x8xbf16>, vector<8x8xbf16>, vector<8x8xf32> -> vector<8x8xf32>
    %cst_26 = arith.constant 0.353553385 : f32
    %73 = vector.broadcast %cst_26 : f32 to vector<8x8xf32>
    %74 = arith.mulf %72, %73 : vector<8x8xf32>
    %75 = arith.addf %74, %34 : vector<8x8xf32>
    %cst_27 = arith.constant dense<0xFF800000> : vector<8xf32>
    %76 = vector.multi_reduction <maximumf>, %75, %cst_27 [1] : vector<8x8xf32> to vector<8xf32>
    %77 = vector.shape_cast %76 : vector<8xf32> to vector<8x1xf32>
    %78 = vector.broadcast %77 : vector<8x1xf32> to vector<8x8xf32>
    %79 = arith.subf %75, %78 : vector<8x8xf32>
    %80 = math.exp %79 : vector<8x8xf32>
    %cst_28 = arith.constant dense<0.000000e+00> : vector<8xf32>
    %81 = vector.multi_reduction <add>, %80, %cst_28 [1] : vector<8x8xf32> to vector<8xf32>
    %82 = vector.shape_cast %81 : vector<8xf32> to vector<8x1xf32>
    %83 = tpu.reciprocal %82 {approx = true} : vector<8x1xf32> -> vector<8x1xf32>
    %84 = vector.broadcast %83 : vector<8x1xf32> to vector<8x8xf32>
    %85 = arith.mulf %80, %84 : vector<8x8xf32>
    %86 = arith.truncf %85 : vector<8x8xf32> to vector<8x8xbf16>
    %cst_29 = arith.constant dense<0.000000e+00> : vector<8x8xf32>
    %87 = tpu.matmul %86, %71, %cst_29 {dimension_numbers = #tpu.dot_dimension_numbers<[1], [0], [0], [1], [0, 0, 1, 1], [], []>} : vector<8x8xbf16>, vector<8x8xbf16>, vector<8x8xf32> -> vector<8x8xf32>
    %88 = arith.truncf %87 : vector<8x8xf32> to vector<8x8xbf16>
    %c1 = arith.constant 1 : index
    %c0_30 = arith.constant 0 : index
    %c0_31 = arith.constant 0 : index
    %89 = vector.load %arg5[%c1, %c0_30, %c0_31] : memref<4x8x32xbf16, #tpu.memory_space<vmem>>, vector<1x8x32xbf16>
    %90 = vector.shape_cast %89 : vector<1x8x32xbf16> to vector<8x32xbf16>
    %cst_32 = arith.constant dense<0.000000e+00> : vector<8x32xf32>
    %91 = tpu.matmul %88, %90, %cst_32 {dimension_numbers = #tpu.dot_dimension_numbers<[1], [0], [0], [1], [0, 0, 1, 1], [], []>} : vector<8x8xbf16>, vector<8x32xbf16>, vector<8x32xf32> -> vector<8x32xf32>
    %92 = arith.addf %65, %91 : vector<8x32xf32>
    %93 = vector.extract_strided_slice %35 {offsets = [0, 16], sizes = [8, 8], strides = [1, 1]} : vector<8x32xf32> to vector<8x8xf32>
    %94 = arith.truncf %93 : vector<8x8xf32> to vector<8x8xbf16>
    %95 = vector.extract_strided_slice %36 {offsets = [0, 16], sizes = [8, 8], strides = [1, 1]} : vector<8x32xf32> to vector<8x8xf32>
    %96 = arith.truncf %95 : vector<8x8xf32> to vector<8x8xbf16>
    %97 = vector.extract_strided_slice %37 {offsets = [0, 16], sizes = [8, 8], strides = [1, 1]} : vector<8x32xf32> to vector<8x8xf32>
    %98 = arith.truncf %97 : vector<8x8xf32> to vector<8x8xbf16>
    %cst_33 = arith.constant dense<0.000000e+00> : vector<8x8xf32>
    %99 = tpu.matmul %94, %96, %cst_33 {dimension_numbers = #tpu.dot_dimension_numbers<[1], [1], [0], [0], [0, 0, 1, 0], [], []>} : vector<8x8xbf16>, vector<8x8xbf16>, vector<8x8xf32> -> vector<8x8xf32>
    %cst_34 = arith.constant 0.353553385 : f32
    %100 = vector.broadcast %cst_34 : f32 to vector<8x8xf32>
    %101 = arith.mulf %99, %100 : vector<8x8xf32>
    %102 = arith.addf %101, %34 : vector<8x8xf32>
    %cst_35 = arith.constant dense<0xFF800000> : vector<8xf32>
    %103 = vector.multi_reduction <maximumf>, %102, %cst_35 [1] : vector<8x8xf32> to vector<8xf32>
    %104 = vector.shape_cast %103 : vector<8xf32> to vector<8x1xf32>
    %105 = vector.broadcast %104 : vector<8x1xf32> to vector<8x8xf32>
    %106 = arith.subf %102, %105 : vector<8x8xf32>
    %107 = math.exp %106 : vector<8x8xf32>
    %cst_36 = arith.constant dense<0.000000e+00> : vector<8xf32>
    %108 = vector.multi_reduction <add>, %107, %cst_36 [1] : vector<8x8xf32> to vector<8xf32>
    %109 = vector.shape_cast %108 : vector<8xf32> to vector<8x1xf32>
    %110 = tpu.reciprocal %109 {approx = true} : vector<8x1xf32> -> vector<8x1xf32>
    %111 = vector.broadcast %110 : vector<8x1xf32> to vector<8x8xf32>
    %112 = arith.mulf %107, %111 : vector<8x8xf32>
    %113 = arith.truncf %112 : vector<8x8xf32> to vector<8x8xbf16>
    %cst_37 = arith.constant dense<0.000000e+00> : vector<8x8xf32>
    %114 = tpu.matmul %113, %98, %cst_37 {dimension_numbers = #tpu.dot_dimension_numbers<[1], [0], [0], [1], [0, 0, 1, 1], [], []>} : vector<8x8xbf16>, vector<8x8xbf16>, vector<8x8xf32> -> vector<8x8xf32>
    %115 = arith.truncf %114 : vector<8x8xf32> to vector<8x8xbf16>
    %c2 = arith.constant 2 : index
    %c0_38 = arith.constant 0 : index
    %c0_39 = arith.constant 0 : index
    %116 = vector.load %arg5[%c2, %c0_38, %c0_39] : memref<4x8x32xbf16, #tpu.memory_space<vmem>>, vector<1x8x32xbf16>
    %117 = vector.shape_cast %116 : vector<1x8x32xbf16> to vector<8x32xbf16>
    %cst_40 = arith.constant dense<0.000000e+00> : vector<8x32xf32>
    %118 = tpu.matmul %115, %117, %cst_40 {dimension_numbers = #tpu.dot_dimension_numbers<[1], [0], [0], [1], [0, 0, 1, 1], [], []>} : vector<8x8xbf16>, vector<8x32xbf16>, vector<8x32xf32> -> vector<8x32xf32>
    %119 = arith.addf %92, %118 : vector<8x32xf32>
    %120 = vector.extract_strided_slice %35 {offsets = [0, 24], sizes = [8, 8], strides = [1, 1]} : vector<8x32xf32> to vector<8x8xf32>
    %121 = arith.truncf %120 : vector<8x8xf32> to vector<8x8xbf16>
    %122 = vector.extract_strided_slice %36 {offsets = [0, 24], sizes = [8, 8], strides = [1, 1]} : vector<8x32xf32> to vector<8x8xf32>
    %123 = arith.truncf %122 : vector<8x8xf32> to vector<8x8xbf16>
    %124 = vector.extract_strided_slice %37 {offsets = [0, 24], sizes = [8, 8], strides = [1, 1]} : vector<8x32xf32> to vector<8x8xf32>
    %125 = arith.truncf %124 : vector<8x8xf32> to vector<8x8xbf16>
    %cst_41 = arith.constant dense<0.000000e+00> : vector<8x8xf32>
    %126 = tpu.matmul %121, %123, %cst_41 {dimension_numbers = #tpu.dot_dimension_numbers<[1], [1], [0], [0], [0, 0, 1, 0], [], []>} : vector<8x8xbf16>, vector<8x8xbf16>, vector<8x8xf32> -> vector<8x8xf32>
    %cst_42 = arith.constant 0.353553385 : f32
    %127 = vector.broadcast %cst_42 : f32 to vector<8x8xf32>
    %128 = arith.mulf %126, %127 : vector<8x8xf32>
    %129 = arith.addf %128, %34 : vector<8x8xf32>
    %cst_43 = arith.constant dense<0xFF800000> : vector<8xf32>
    %130 = vector.multi_reduction <maximumf>, %129, %cst_43 [1] : vector<8x8xf32> to vector<8xf32>
    %131 = vector.shape_cast %130 : vector<8xf32> to vector<8x1xf32>
    %132 = vector.broadcast %131 : vector<8x1xf32> to vector<8x8xf32>
    %133 = arith.subf %129, %132 : vector<8x8xf32>
    %134 = math.exp %133 : vector<8x8xf32>
    %cst_44 = arith.constant dense<0.000000e+00> : vector<8xf32>
    %135 = vector.multi_reduction <add>, %134, %cst_44 [1] : vector<8x8xf32> to vector<8xf32>
    %136 = vector.shape_cast %135 : vector<8xf32> to vector<8x1xf32>
    %137 = tpu.reciprocal %136 {approx = true} : vector<8x1xf32> -> vector<8x1xf32>
    %138 = vector.broadcast %137 : vector<8x1xf32> to vector<8x8xf32>
    %139 = arith.mulf %134, %138 : vector<8x8xf32>
    %140 = arith.truncf %139 : vector<8x8xf32> to vector<8x8xbf16>
    %cst_45 = arith.constant dense<0.000000e+00> : vector<8x8xf32>
    %141 = tpu.matmul %140, %125, %cst_45 {dimension_numbers = #tpu.dot_dimension_numbers<[1], [0], [0], [1], [0, 0, 1, 1], [], []>} : vector<8x8xbf16>, vector<8x8xbf16>, vector<8x8xf32> -> vector<8x8xf32>
    %142 = arith.truncf %141 : vector<8x8xf32> to vector<8x8xbf16>
    %c3 = arith.constant 3 : index
    %c0_46 = arith.constant 0 : index
    %c0_47 = arith.constant 0 : index
    %143 = vector.load %arg5[%c3, %c0_46, %c0_47] : memref<4x8x32xbf16, #tpu.memory_space<vmem>>, vector<1x8x32xbf16>
    %144 = vector.shape_cast %143 : vector<1x8x32xbf16> to vector<8x32xbf16>
    %cst_48 = arith.constant dense<0.000000e+00> : vector<8x32xf32>
    %145 = tpu.matmul %142, %144, %cst_48 {dimension_numbers = #tpu.dot_dimension_numbers<[1], [0], [0], [1], [0, 0, 1, 1], [], []>} : vector<8x8xbf16>, vector<8x32xbf16>, vector<8x32xf32> -> vector<8x32xf32>
    %146 = arith.addf %119, %145 : vector<8x32xf32>
    %147 = vector.extract_strided_slice %28 {offsets = [8, 0], sizes = [8, 32], strides = [1, 1]} : vector<16x96xf32> to vector<8x32xf32>
    %148 = vector.extract_strided_slice %28 {offsets = [8, 32], sizes = [8, 32], strides = [1, 1]} : vector<16x96xf32> to vector<8x32xf32>
    %149 = vector.extract_strided_slice %28 {offsets = [8, 64], sizes = [8, 32], strides = [1, 1]} : vector<16x96xf32> to vector<8x32xf32>
    %cst_49 = arith.constant 0.000000e+00 : f32
    %150 = vector.broadcast %cst_49 : f32 to vector<8x32xf32>
    %151 = vector.extract_strided_slice %147 {offsets = [0, 0], sizes = [8, 8], strides = [1, 1]} : vector<8x32xf32> to vector<8x8xf32>
    %152 = arith.truncf %151 : vector<8x8xf32> to vector<8x8xbf16>
    %153 = vector.extract_strided_slice %148 {offsets = [0, 0], sizes = [8, 8], strides = [1, 1]} : vector<8x32xf32> to vector<8x8xf32>
    %154 = arith.truncf %153 : vector<8x8xf32> to vector<8x8xbf16>
    %155 = vector.extract_strided_slice %149 {offsets = [0, 0], sizes = [8, 8], strides = [1, 1]} : vector<8x32xf32> to vector<8x8xf32>
    %156 = arith.truncf %155 : vector<8x8xf32> to vector<8x8xbf16>
    %cst_50 = arith.constant dense<0.000000e+00> : vector<8x8xf32>
    %157 = tpu.matmul %152, %154, %cst_50 {dimension_numbers = #tpu.dot_dimension_numbers<[1], [1], [0], [0], [0, 0, 1, 0], [], []>} : vector<8x8xbf16>, vector<8x8xbf16>, vector<8x8xf32> -> vector<8x8xf32>
    %cst_51 = arith.constant 0.353553385 : f32
    %158 = vector.broadcast %cst_51 : f32 to vector<8x8xf32>
    %159 = arith.mulf %157, %158 : vector<8x8xf32>
    %160 = arith.addf %159, %34 : vector<8x8xf32>
    %cst_52 = arith.constant dense<0xFF800000> : vector<8xf32>
    %161 = vector.multi_reduction <maximumf>, %160, %cst_52 [1] : vector<8x8xf32> to vector<8xf32>
    %162 = vector.shape_cast %161 : vector<8xf32> to vector<8x1xf32>
    %163 = vector.broadcast %162 : vector<8x1xf32> to vector<8x8xf32>
    %164 = arith.subf %160, %163 : vector<8x8xf32>
    %165 = math.exp %164 : vector<8x8xf32>
    %cst_53 = arith.constant dense<0.000000e+00> : vector<8xf32>
    %166 = vector.multi_reduction <add>, %165, %cst_53 [1] : vector<8x8xf32> to vector<8xf32>
    %167 = vector.shape_cast %166 : vector<8xf32> to vector<8x1xf32>
    %168 = tpu.reciprocal %167 {approx = true} : vector<8x1xf32> -> vector<8x1xf32>
    %169 = vector.broadcast %168 : vector<8x1xf32> to vector<8x8xf32>
    %170 = arith.mulf %165, %169 : vector<8x8xf32>
    %171 = arith.truncf %170 : vector<8x8xf32> to vector<8x8xbf16>
    %cst_54 = arith.constant dense<0.000000e+00> : vector<8x8xf32>
    %172 = tpu.matmul %171, %156, %cst_54 {dimension_numbers = #tpu.dot_dimension_numbers<[1], [0], [0], [1], [0, 0, 1, 1], [], []>} : vector<8x8xbf16>, vector<8x8xbf16>, vector<8x8xf32> -> vector<8x8xf32>
    %173 = arith.truncf %172 : vector<8x8xf32> to vector<8x8xbf16>
    %c0_55 = arith.constant 0 : index
    %c0_56 = arith.constant 0 : index
    %c0_57 = arith.constant 0 : index
    %174 = vector.load %arg5[%c0_55, %c0_56, %c0_57] : memref<4x8x32xbf16, #tpu.memory_space<vmem>>, vector<1x8x32xbf16>
    %175 = vector.shape_cast %174 : vector<1x8x32xbf16> to vector<8x32xbf16>
    %cst_58 = arith.constant dense<0.000000e+00> : vector<8x32xf32>
    %176 = tpu.matmul %173, %175, %cst_58 {dimension_numbers = #tpu.dot_dimension_numbers<[1], [0], [0], [1], [0, 0, 1, 1], [], []>} : vector<8x8xbf16>, vector<8x32xbf16>, vector<8x32xf32> -> vector<8x32xf32>
    %177 = arith.addf %150, %176 : vector<8x32xf32>
    %178 = vector.extract_strided_slice %147 {offsets = [0, 8], sizes = [8, 8], strides = [1, 1]} : vector<8x32xf32> to vector<8x8xf32>
    %179 = arith.truncf %178 : vector<8x8xf32> to vector<8x8xbf16>
    %180 = vector.extract_strided_slice %148 {offsets = [0, 8], sizes = [8, 8], strides = [1, 1]} : vector<8x32xf32> to vector<8x8xf32>
    %181 = arith.truncf %180 : vector<8x8xf32> to vector<8x8xbf16>
    %182 = vector.extract_strided_slice %149 {offsets = [0, 8], sizes = [8, 8], strides = [1, 1]} : vector<8x32xf32> to vector<8x8xf32>
    %183 = arith.truncf %182 : vector<8x8xf32> to vector<8x8xbf16>
    %cst_59 = arith.constant dense<0.000000e+00> : vector<8x8xf32>
    %184 = tpu.matmul %179, %181, %cst_59 {dimension_numbers = #tpu.dot_dimension_numbers<[1], [1], [0], [0], [0, 0, 1, 0], [], []>} : vector<8x8xbf16>, vector<8x8xbf16>, vector<8x8xf32> -> vector<8x8xf32>
    %cst_60 = arith.constant 0.353553385 : f32
    %185 = vector.broadcast %cst_60 : f32 to vector<8x8xf32>
    %186 = arith.mulf %184, %185 : vector<8x8xf32>
    %187 = arith.addf %186, %34 : vector<8x8xf32>
    %cst_61 = arith.constant dense<0xFF800000> : vector<8xf32>
    %188 = vector.multi_reduction <maximumf>, %187, %cst_61 [1] : vector<8x8xf32> to vector<8xf32>
    %189 = vector.shape_cast %188 : vector<8xf32> to vector<8x1xf32>
    %190 = vector.broadcast %189 : vector<8x1xf32> to vector<8x8xf32>
    %191 = arith.subf %187, %190 : vector<8x8xf32>
    %192 = math.exp %191 : vector<8x8xf32>
    %cst_62 = arith.constant dense<0.000000e+00> : vector<8xf32>
    %193 = vector.multi_reduction <add>, %192, %cst_62 [1] : vector<8x8xf32> to vector<8xf32>
    %194 = vector.shape_cast %193 : vector<8xf32> to vector<8x1xf32>
    %195 = tpu.reciprocal %194 {approx = true} : vector<8x1xf32> -> vector<8x1xf32>
    %196 = vector.broadcast %195 : vector<8x1xf32> to vector<8x8xf32>
    %197 = arith.mulf %192, %196 : vector<8x8xf32>
    %198 = arith.truncf %197 : vector<8x8xf32> to vector<8x8xbf16>
    %cst_63 = arith.constant dense<0.000000e+00> : vector<8x8xf32>
    %199 = tpu.matmul %198, %183, %cst_63 {dimension_numbers = #tpu.dot_dimension_numbers<[1], [0], [0], [1], [0, 0, 1, 1], [], []>} : vector<8x8xbf16>, vector<8x8xbf16>, vector<8x8xf32> -> vector<8x8xf32>
    %200 = arith.truncf %199 : vector<8x8xf32> to vector<8x8xbf16>
    %c1_64 = arith.constant 1 : index
    %c0_65 = arith.constant 0 : index
    %c0_66 = arith.constant 0 : index
    %201 = vector.load %arg5[%c1_64, %c0_65, %c0_66] : memref<4x8x32xbf16, #tpu.memory_space<vmem>>, vector<1x8x32xbf16>
    %202 = vector.shape_cast %201 : vector<1x8x32xbf16> to vector<8x32xbf16>
    %cst_67 = arith.constant dense<0.000000e+00> : vector<8x32xf32>
    %203 = tpu.matmul %200, %202, %cst_67 {dimension_numbers = #tpu.dot_dimension_numbers<[1], [0], [0], [1], [0, 0, 1, 1], [], []>} : vector<8x8xbf16>, vector<8x32xbf16>, vector<8x32xf32> -> vector<8x32xf32>
    %204 = arith.addf %177, %203 : vector<8x32xf32>
    %205 = vector.extract_strided_slice %147 {offsets = [0, 16], sizes = [8, 8], strides = [1, 1]} : vector<8x32xf32> to vector<8x8xf32>
    %206 = arith.truncf %205 : vector<8x8xf32> to vector<8x8xbf16>
    %207 = vector.extract_strided_slice %148 {offsets = [0, 16], sizes = [8, 8], strides = [1, 1]} : vector<8x32xf32> to vector<8x8xf32>
    %208 = arith.truncf %207 : vector<8x8xf32> to vector<8x8xbf16>
    %209 = vector.extract_strided_slice %149 {offsets = [0, 16], sizes = [8, 8], strides = [1, 1]} : vector<8x32xf32> to vector<8x8xf32>
    %210 = arith.truncf %209 : vector<8x8xf32> to vector<8x8xbf16>
    %cst_68 = arith.constant dense<0.000000e+00> : vector<8x8xf32>
    %211 = tpu.matmul %206, %208, %cst_68 {dimension_numbers = #tpu.dot_dimension_numbers<[1], [1], [0], [0], [0, 0, 1, 0], [], []>} : vector<8x8xbf16>, vector<8x8xbf16>, vector<8x8xf32> -> vector<8x8xf32>
    %cst_69 = arith.constant 0.353553385 : f32
    %212 = vector.broadcast %cst_69 : f32 to vector<8x8xf32>
    %213 = arith.mulf %211, %212 : vector<8x8xf32>
    %214 = arith.addf %213, %34 : vector<8x8xf32>
    %cst_70 = arith.constant dense<0xFF800000> : vector<8xf32>
    %215 = vector.multi_reduction <maximumf>, %214, %cst_70 [1] : vector<8x8xf32> to vector<8xf32>
    %216 = vector.shape_cast %215 : vector<8xf32> to vector<8x1xf32>
    %217 = vector.broadcast %216 : vector<8x1xf32> to vector<8x8xf32>
    %218 = arith.subf %214, %217 : vector<8x8xf32>
    %219 = math.exp %218 : vector<8x8xf32>
    %cst_71 = arith.constant dense<0.000000e+00> : vector<8xf32>
    %220 = vector.multi_reduction <add>, %219, %cst_71 [1] : vector<8x8xf32> to vector<8xf32>
    %221 = vector.shape_cast %220 : vector<8xf32> to vector<8x1xf32>
    %222 = tpu.reciprocal %221 {approx = true} : vector<8x1xf32> -> vector<8x1xf32>
    %223 = vector.broadcast %222 : vector<8x1xf32> to vector<8x8xf32>
    %224 = arith.mulf %219, %223 : vector<8x8xf32>
    %225 = arith.truncf %224 : vector<8x8xf32> to vector<8x8xbf16>
    %cst_72 = arith.constant dense<0.000000e+00> : vector<8x8xf32>
    %226 = tpu.matmul %225, %210, %cst_72 {dimension_numbers = #tpu.dot_dimension_numbers<[1], [0], [0], [1], [0, 0, 1, 1], [], []>} : vector<8x8xbf16>, vector<8x8xbf16>, vector<8x8xf32> -> vector<8x8xf32>
    %227 = arith.truncf %226 : vector<8x8xf32> to vector<8x8xbf16>
    %c2_73 = arith.constant 2 : index
    %c0_74 = arith.constant 0 : index
    %c0_75 = arith.constant 0 : index
    %228 = vector.load %arg5[%c2_73, %c0_74, %c0_75] : memref<4x8x32xbf16, #tpu.memory_space<vmem>>, vector<1x8x32xbf16>
    %229 = vector.shape_cast %228 : vector<1x8x32xbf16> to vector<8x32xbf16>
    %cst_76 = arith.constant dense<0.000000e+00> : vector<8x32xf32>
    %230 = tpu.matmul %227, %229, %cst_76 {dimension_numbers = #tpu.dot_dimension_numbers<[1], [0], [0], [1], [0, 0, 1, 1], [], []>} : vector<8x8xbf16>, vector<8x32xbf16>, vector<8x32xf32> -> vector<8x32xf32>
    %231 = arith.addf %204, %230 : vector<8x32xf32>
    %232 = vector.extract_strided_slice %147 {offsets = [0, 24], sizes = [8, 8], strides = [1, 1]} : vector<8x32xf32> to vector<8x8xf32>
    %233 = arith.truncf %232 : vector<8x8xf32> to vector<8x8xbf16>
    %234 = vector.extract_strided_slice %148 {offsets = [0, 24], sizes = [8, 8], strides = [1, 1]} : vector<8x32xf32> to vector<8x8xf32>
    %235 = arith.truncf %234 : vector<8x8xf32> to vector<8x8xbf16>
    %236 = vector.extract_strided_slice %149 {offsets = [0, 24], sizes = [8, 8], strides = [1, 1]} : vector<8x32xf32> to vector<8x8xf32>
    %237 = arith.truncf %236 : vector<8x8xf32> to vector<8x8xbf16>
    %cst_77 = arith.constant dense<0.000000e+00> : vector<8x8xf32>
    %238 = tpu.matmul %233, %235, %cst_77 {dimension_numbers = #tpu.dot_dimension_numbers<[1], [1], [0], [0], [0, 0, 1, 0], [], []>} : vector<8x8xbf16>, vector<8x8xbf16>, vector<8x8xf32> -> vector<8x8xf32>
    %cst_78 = arith.constant 0.353553385 : f32
    %239 = vector.broadcast %cst_78 : f32 to vector<8x8xf32>
    %240 = arith.mulf %238, %239 : vector<8x8xf32>
    %241 = arith.addf %240, %34 : vector<8x8xf32>
    %cst_79 = arith.constant dense<0xFF800000> : vector<8xf32>
    %242 = vector.multi_reduction <maximumf>, %241, %cst_79 [1] : vector<8x8xf32> to vector<8xf32>
    %243 = vector.shape_cast %242 : vector<8xf32> to vector<8x1xf32>
    %244 = vector.broadcast %243 : vector<8x1xf32> to vector<8x8xf32>
    %245 = arith.subf %241, %244 : vector<8x8xf32>
    %246 = math.exp %245 : vector<8x8xf32>
    %cst_80 = arith.constant dense<0.000000e+00> : vector<8xf32>
    %247 = vector.multi_reduction <add>, %246, %cst_80 [1] : vector<8x8xf32> to vector<8xf32>
    %248 = vector.shape_cast %247 : vector<8xf32> to vector<8x1xf32>
    %249 = tpu.reciprocal %248 {approx = true} : vector<8x1xf32> -> vector<8x1xf32>
    %250 = vector.broadcast %249 : vector<8x1xf32> to vector<8x8xf32>
    %251 = arith.mulf %246, %250 : vector<8x8xf32>
    %252 = arith.truncf %251 : vector<8x8xf32> to vector<8x8xbf16>
    %cst_81 = arith.constant dense<0.000000e+00> : vector<8x8xf32>
    %253 = tpu.matmul %252, %237, %cst_81 {dimension_numbers = #tpu.dot_dimension_numbers<[1], [0], [0], [1], [0, 0, 1, 1], [], []>} : vector<8x8xbf16>, vector<8x8xbf16>, vector<8x8xf32> -> vector<8x8xf32>
    %254 = arith.truncf %253 : vector<8x8xf32> to vector<8x8xbf16>
    %c3_82 = arith.constant 3 : index
    %c0_83 = arith.constant 0 : index
    %c0_84 = arith.constant 0 : index
    %255 = vector.load %arg5[%c3_82, %c0_83, %c0_84] : memref<4x8x32xbf16, #tpu.memory_space<vmem>>, vector<1x8x32xbf16>
    %256 = vector.shape_cast %255 : vector<1x8x32xbf16> to vector<8x32xbf16>
    %cst_85 = arith.constant dense<0.000000e+00> : vector<8x32xf32>
    %257 = tpu.matmul %254, %256, %cst_85 {dimension_numbers = #tpu.dot_dimension_numbers<[1], [0], [0], [1], [0, 0, 1, 1], [], []>} : vector<8x8xbf16>, vector<8x32xbf16>, vector<8x32xf32> -> vector<8x32xf32>
    %258 = arith.addf %231, %257 : vector<8x32xf32>
    %259 = tpu.concatenate %146, %258 in 0 : vector<8x32xf32>, vector<8x32xf32> -> vector<16x32xf32>
    %c0_86 = arith.constant 0 : index
    %c0_87 = arith.constant 0 : index
    %260 = vector.load %arg6[%c0_86, %c0_87] : memref<1x32xf32, #tpu.memory_space<vmem>>, vector<1x32xf32>
    %261 = vector.broadcast %260 : vector<1x32xf32> to vector<16x32xf32>
    %262 = arith.addf %259, %261 : vector<16x32xf32>
    %263 = arith.addf %262, %1 : vector<16x32xf32>
    %c0_88 = arith.constant 0 : index
    %c0_89 = arith.constant 0 : index
    %264 = vector.load %arg11[%c0_88, %c0_89] : memref<1x32xf32, #tpu.memory_space<vmem>>, vector<1x32xf32>
    %c0_90 = arith.constant 0 : index
    %c0_91 = arith.constant 0 : index
    %265 = vector.load %arg12[%c0_90, %c0_91] : memref<1x32xf32, #tpu.memory_space<vmem>>, vector<1x32xf32>
    %cst_92 = arith.constant dense<0.000000e+00> : vector<16xf32>
    %266 = vector.multi_reduction <add>, %263, %cst_92 [1] : vector<16x32xf32> to vector<16xf32>
    %267 = vector.shape_cast %266 : vector<16xf32> to vector<16x1xf32>
    %cst_93 = arith.constant 3.200000e+01 : f32
    %268 = vector.broadcast %cst_93 : f32 to vector<16x1xf32>
    %269 = arith.divf %267, %268 : vector<16x1xf32>
    %270 = vector.broadcast %269 : vector<16x1xf32> to vector<16x32xf32>
    %271 = arith.subf %263, %270 : vector<16x32xf32>
    %272 = arith.mulf %271, %271 : vector<16x32xf32>
    %cst_94 = arith.constant dense<0.000000e+00> : vector<16xf32>
    %273 = vector.multi_reduction <add>, %272, %cst_94 [1] : vector<16x32xf32> to vector<16xf32>
    %274 = vector.shape_cast %273 : vector<16xf32> to vector<16x1xf32>
    %cst_95 = arith.constant 3.200000e+01 : f32
    %275 = vector.broadcast %cst_95 : f32 to vector<16x1xf32>
    %276 = arith.divf %274, %275 : vector<16x1xf32>
    %277 = vector.broadcast %269 : vector<16x1xf32> to vector<16x32xf32>
    %278 = arith.subf %263, %277 : vector<16x32xf32>
    %cst_96 = arith.constant 1.000000e-07 : f32
    %279 = vector.broadcast %cst_96 : f32 to vector<16x1xf32>
    %280 = arith.addf %276, %279 : vector<16x1xf32>
    %281 = math.rsqrt %280 : vector<16x1xf32>
    %282 = vector.broadcast %281 : vector<16x1xf32> to vector<16x32xf32>
    %283 = arith.mulf %278, %282 : vector<16x32xf32>
    %284 = vector.broadcast %265 : vector<1x32xf32> to vector<16x32xf32>
    %285 = arith.addf %283, %284 : vector<16x32xf32>
    %286 = vector.broadcast %264 : vector<1x32xf32> to vector<16x32xf32>
    %287 = arith.mulf %285, %286 : vector<16x32xf32>
    %288 = arith.truncf %287 : vector<16x32xf32> to vector<16x32xbf16>
    %c0_97 = arith.constant 0 : index
    %c0_98 = arith.constant 0 : index
    %289 = vector.load %arg7[%c0_97, %c0_98] : memref<32x128xbf16, #tpu.memory_space<vmem>>, vector<32x128xbf16>
    %cst_99 = arith.constant dense<0.000000e+00> : vector<16x128xf32>
    %290 = tpu.matmul %288, %289, %cst_99 {dimension_numbers = #tpu.dot_dimension_numbers<[1], [0], [0], [1], [0, 0, 1, 1], [], []>} : vector<16x32xbf16>, vector<32x128xbf16>, vector<16x128xf32> -> vector<16x128xf32>
    %c0_100 = arith.constant 0 : index
    %c0_101 = arith.constant 0 : index
    %291 = vector.load %arg8[%c0_100, %c0_101] : memref<1x128xf32, #tpu.memory_space<vmem>>, vector<1x128xf32>
    %292 = vector.broadcast %291 : vector<1x128xf32> to vector<16x128xf32>
    %293 = arith.addf %290, %292 : vector<16x128xf32>
    %cst_102 = arith.constant 5.000000e-01 : f32
    %294 = vector.broadcast %cst_102 : f32 to vector<16x128xf32>
    %295 = arith.mulf %294, %293 : vector<16x128xf32>
    %cst_103 = arith.constant 4.471500e-02 : f32
    %296 = vector.broadcast %cst_103 : f32 to vector<16x128xf32>
    %297 = arith.mulf %296, %293 : vector<16x128xf32>
    %298 = arith.mulf %297, %293 : vector<16x128xf32>
    %299 = arith.mulf %298, %293 : vector<16x128xf32>
    %300 = arith.addf %293, %299 : vector<16x128xf32>
    %cst_104 = arith.constant 0.797884583 : f32
    %301 = vector.broadcast %cst_104 : f32 to vector<16x128xf32>
    %302 = arith.mulf %301, %300 : vector<16x128xf32>
    %303 = math.tanh %302 : vector<16x128xf32>
    %cst_105 = arith.constant 1.000000e+00 : f32
    %304 = vector.broadcast %cst_105 : f32 to vector<16x128xf32>
    %305 = arith.addf %304, %303 : vector<16x128xf32>
    %306 = arith.mulf %295, %305 : vector<16x128xf32>
    %307 = arith.truncf %306 : vector<16x128xf32> to vector<16x128xbf16>
    %c0_106 = arith.constant 0 : index
    %c0_107 = arith.constant 0 : index
    %308 = vector.load %arg9[%c0_106, %c0_107] : memref<128x32xbf16, #tpu.memory_space<vmem>>, vector<128x32xbf16>
    %cst_108 = arith.constant dense<0.000000e+00> : vector<16x32xf32>
    %309 = tpu.matmul %307, %308, %cst_108 {dimension_numbers = #tpu.dot_dimension_numbers<[1], [0], [0], [1], [0, 0, 1, 1], [], []>} : vector<16x128xbf16>, vector<128x32xbf16>, vector<16x32xf32> -> vector<16x32xf32>
    %c0_109 = arith.constant 0 : index
    %c0_110 = arith.constant 0 : index
    %310 = vector.load %arg10[%c0_109, %c0_110] : memref<1x32xf32, #tpu.memory_space<vmem>>, vector<1x32xf32>
    %311 = vector.broadcast %310 : vector<1x32xf32> to vector<16x32xf32>
    %312 = arith.addf %309, %311 : vector<16x32xf32>
    %313 = arith.addf %312, %263 : vector<16x32xf32>
    %314 = vector.shape_cast %313 : vector<16x32xf32> to vector<2x8x32xf32>
    %c0_111 = arith.constant 0 : index
    %c0_112 = arith.constant 0 : index
    %c0_113 = arith.constant 0 : index
    %315 = vector.load %arg13[%c0_111, %c0_112, %c0_113] : memref<2x8x32xf32, #tpu.memory_space<vmem>>, vector<2x8x32xf32>
    tpu.vector_store %arg13[%c0_111, %c0_112, %c0_113], %314 {strides = array<i32>} : memref<2x8x32xf32, #tpu.memory_space<vmem>>, vector<2x8x32xf32>,
    return
  }
  func.func @transform_0(%arg0: i32) -> (i32, i32, i32) {
    %c0_i32 = arith.constant 0 : i32
    %c0_i32_0 = arith.constant 0 : i32
    %c0_i32_1 = arith.constant 0 : i32
    return %arg0, %c0_i32, %c0_i32_0 : i32, i32, i32
  }
  func.func @transform_1(%arg0: i32) -> (i32, i32) {
    %c0_i32 = arith.constant 0 : i32
    %c0_i32_0 = arith.constant 0 : i32
    %c0_i32_1 = arith.constant 0 : i32
    return %c0_i32, %c0_i32_0 : i32, i32
  }
  func.func @transform_2(%arg0: i32) -> (i32, i32) {
    %c0_i32 = arith.constant 0 : i32
    %c0_i32_0 = arith.constant 0 : i32
    %c0_i32_1 = arith.constant 0 : i32
    return %c0_i32, %c0_i32_0 : i32, i32
  }
  func.func @transform_3(%arg0: i32) -> (i32, i32) {
    %c0_i32 = arith.constant 0 : i32
    %c0_i32_0 = arith.constant 0 : i32
    %c0_i32_1 = arith.constant 0 : i32
    return %c0_i32, %c0_i32_0 : i32, i32
  }
  func.func @transform_4(%arg0: i32) -> (i32, i32, i32) {
    %c0_i32 = arith.constant 0 : i32
    %c0_i32_0 = arith.constant 0 : i32
    %c0_i32_1 = arith.constant 0 : i32
    %c0_i32_2 = arith.constant 0 : i32
    return %c0_i32, %c0_i32_0, %c0_i32_1 : i32, i32, i32
  }
  func.func @transform_5(%arg0: i32) -> (i32, i32) {
    %c0_i32 = arith.constant 0 : i32
    %c0_i32_0 = arith.constant 0 : i32
    %c0_i32_1 = arith.constant 0 : i32
    return %c0_i32, %c0_i32_0 : i32, i32
  }
  func.func @transform_6(%arg0: i32) -> (i32, i32) {
    %c0_i32 = arith.constant 0 : i32
    %c0_i32_0 = arith.constant 0 : i32
    %c0_i32_1 = arith.constant 0 : i32
    return %c0_i32, %c0_i32_0 : i32, i32
  }
  func.func @transform_7(%arg0: i32) -> (i32, i32) {
    %c0_i32 = arith.constant 0 : i32
    %c0_i32_0 = arith.constant 0 : i32
    %c0_i32_1 = arith.constant 0 : i32
    return %c0_i32, %c0_i32_0 : i32, i32
  }
  func.func @transform_8(%arg0: i32) -> (i32, i32) {
    %c0_i32 = arith.constant 0 : i32
    %c0_i32_0 = arith.constant 0 : i32
    %c0_i32_1 = arith.constant 0 : i32
    return %c0_i32, %c0_i32_0 : i32, i32
  }
  func.func @transform_9(%arg0: i32) -> (i32, i32) {
    %c0_i32 = arith.constant 0 : i32
    %c0_i32_0 = arith.constant 0 : i32
    %c0_i32_1 = arith.constant 0 : i32
    return %c0_i32, %c0_i32_0 : i32, i32
  }
  func.func @transform_10(%arg0: i32) -> (i32, i32) {
    %c0_i32 = arith.constant 0 : i32
    %c0_i32_0 = arith.constant 0 : i32
    %c0_i32_1 = arith.constant 0 : i32
    return %c0_i32, %c0_i32_0 : i32, i32
  }
  func.func @transform_11(%arg0: i32) -> (i32, i32) {
    %c0_i32 = arith.constant 0 : i32
    %c0_i32_0 = arith.constant 0 : i32
    %c0_i32_1 = arith.constant 0 : i32
    return %c0_i32, %c0_i32_0 : i32, i32
  }
  func.func @transform_12(%arg0: i32) -> (i32, i32, i32) {
    %c0_i32 = arith.constant 0 : i32
    %c0_i32_0 = arith.constant 0 : i32
    %c0_i32_1 = arith.constant 0 : i32
    return %arg0, %c0_i32, %c0_i32_0 : i32, i32, i32
  }
}

</mosaic_0001>

<llo_original>
// kernel: tpu_custom_call.1
$region0: #{tpu_custom_call.1}
  #allocation0 [shape = 'u32[]', space=smem, size = 0x4, offset = 0x4, fixed_abs, tag = 'smem constant byte address 0x4 - core index']
  #allocation1 [shape = 'u32[144,128]{1,0:T(1,128)}', space=vmem, size = 0x12000, scoped, tag = 'internal scratch']
  %s0 = inlined_call_operand.vmem [shape: f32[2,8,32], index: 0, kind: input, shape index: {}]
  %s1 = inlined_call_operand.vmem [shape: f32[1,32], index: 1, kind: input, shape index: {}]
  %s2 = inlined_call_operand.vmem [shape: f32[1,32], index: 2, kind: input, shape index: {}]
  %s3 = inlined_call_operand.vmem [shape: bf16[32,96], index: 3, kind: input, shape index: {}]
  %s4 = inlined_call_operand.vmem [shape: bf16[4,8,32], index: 4, kind: input, shape index: {}]
  %s5 = inlined_call_operand.vmem [shape: f32[1,32], index: 5, kind: input, shape index: {}]
  %s6 = inlined_call_operand.vmem [shape: bf16[32,128], index: 6, kind: input, shape index: {}]
  %s7 = inlined_call_operand.vmem [shape: f32[1,128], index: 7, kind: input, shape index: {}]
  %s8 = inlined_call_operand.vmem [shape: bf16[128,32], index: 8, kind: input, shape index: {}]
  %s9 = inlined_call_operand.vmem [shape: f32[1,32], index: 9, kind: input, shape index: {}]
  %s10 = inlined_call_operand.vmem [shape: f32[1,32], index: 10, kind: input, shape index: {}]
  %s11 = inlined_call_operand.vmem [shape: f32[1,32], index: 11, kind: input, shape index: {}]
  %s12 = inlined_call_operand.hbm [shape: f32[2,8,32], index: 12, kind: output, shape index: {}]
  %s13 = sld [smem:[#allocation0]]
  $region58: #{tpu_custom_call.1} parent=0
    _
  %s15 = ssub.s32 1, %s13
  %s16 = scalar_select 0, %s15, %s13
  $region1: #{tpu_custom_call.1} parent=0
    #allocation2 [shape = 'u8[8192]{0}', space=vmem, size = 0x2000, scoped, tag = 'output window, operand 0, single buffered']
    #allocation3 [shape = 's32[1]{0}', space=sflag, size = 0x4, scoped, tag = 'scoped memory for tpu_custom_call.1']
    %17 = vsyncpa [#allocation3], 0
    // Predicated region
    $region2: #{tpu_custom_call.1} parent=1 // pred_check
      _
    $region3: #{tpu_custom_call.1} parent=1 // pred_check_branch
      %19 = sbr.rel (0) target = $region5
    $region4: #{tpu_custom_call.1} parent=1 // pred_region
      _
    $region5: #{tpu_custom_call.1} parent=1 // pred_fallthru
      _
    // Predicated region
    $region6: #{tpu_custom_call.1} parent=1 // pred_check
      _
    $region7: #{tpu_custom_call.1} parent=1 // pred_check_branch
      %21 = sbr.rel (0) target = $region9
    $region8: #{tpu_custom_call.1} parent=1 // pred_region
      _
    $region9: #{tpu_custom_call.1} parent=1 // pred_fallthru
      _
    // Predicated region
    $region10: #{tpu_custom_call.1} parent=1 // pred_check
      _
    $region11: #{tpu_custom_call.1} parent=1 // pred_check_branch
      %23 = sbr.rel (0) target = $region13
    $region12: #{tpu_custom_call.1} parent=1 // pred_region
      _
    $region13: #{tpu_custom_call.1} parent=1 // pred_fallthru
      _
    // Predicated region
    $region14: #{tpu_custom_call.1} parent=1 // pred_check
      _
    $region15: #{tpu_custom_call.1} parent=1 // pred_check_branch
      %25 = sbr.rel (0) target = $region17
    $region16: #{tpu_custom_call.1} parent=1 // pred_region
      _
    $region17: #{tpu_custom_call.1} parent=1 // pred_fallthru
      _
    // Predicated region
    $region18: #{tpu_custom_call.1} parent=1 // pred_check
      _
    $region19: #{tpu_custom_call.1} parent=1 // pred_check_branch
      %27 = sbr.rel (0) target = $region21
    $region20: #{tpu_custom_call.1} parent=1 // pred_region
      _
    $region21: #{tpu_custom_call.1} parent=1 // pred_fallthru
      _
    // Predicated region
    $region22: #{tpu_custom_call.1} parent=1 // pred_check
      _
    $region23: #{tpu_custom_call.1} parent=1 // pred_check_branch
      %29 = sbr.rel (0) target = $region25
    $region24: #{tpu_custom_call.1} parent=1 // pred_region
      _
    $region25: #{tpu_custom_call.1} parent=1 // pred_fallthru
      _
    // Predicated region
    $region26: #{tpu_custom_call.1} parent=1 // pred_check
      _
    $region27: #{tpu_custom_call.1} parent=1 // pred_check_branch
      %31 = sbr.rel (0) target = $region29
    $region28: #{tpu_custom_call.1} parent=1 // pred_region
      _
    $region29: #{tpu_custom_call.1} parent=1 // pred_fallthru
      _
    // Predicated region
    $region30: #{tpu_custom_call.1} parent=1 // pred_check
      _
    $region31: #{tpu_custom_call.1} parent=1 // pred_check_branch
      %33 = sbr.rel (0) target = $region33
    $region32: #{tpu_custom_call.1} parent=1 // pred_region
      _
    $region33: #{tpu_custom_call.1} parent=1 // pred_fallthru
      _
    // Predicated region
    $region34: #{tpu_custom_call.1} parent=1 // pred_check
      _
    $region35: #{tpu_custom_call.1} parent=1 // pred_check_branch
      %35 = sbr.rel (0) target = $region37
    $region36: #{tpu_custom_call.1} parent=1 // pred_region
      _
    $region37: #{tpu_custom_call.1} parent=1 // pred_fallthru
      _
    // Predicated region
    $region38: #{tpu_custom_call.1} parent=1 // pred_check
      _
    $region39: #{tpu_custom_call.1} parent=1 // pred_check_branch
      %37 = sbr.rel (0) target = $region41
    $region40: #{tpu_custom_call.1} parent=1 // pred_region
      _
    $region41: #{tpu_custom_call.1} parent=1 // pred_fallthru
      _
    // Predicated region
    $region42: #{tpu_custom_call.1} parent=1 // pred_check
      _
    $region43: #{tpu_custom_call.1} parent=1 // pred_check_branch
      %39 = sbr.rel (0) target = $region45
    $region44: #{tpu_custom_call.1} parent=1 // pred_region
      _
    $region45: #{tpu_custom_call.1} parent=1 // pred_fallthru
      _
    // Predicated region
    $region46: #{tpu_custom_call.1} parent=1 // pred_check
      _
    $region47: #{tpu_custom_call.1} parent=1 // pred_check_branch
      %41 = sbr.rel (0) target = $region49
    $region48: #{tpu_custom_call.1} parent=1 // pred_region
      _
    $region49: #{tpu_custom_call.1} parent=1 // pred_fallthru
      _
    %v43 = vld [vmem:[%s0] sm:$0xff]
    %v44 = vld [vmem:[%s0 + $0x8] sm:$0xff]
    %v45 = vld [vmem:[%s1] sm:$0x1]
    %v46 = vld [vmem:[%s2] sm:$0x1]
    %vm47 = vcmask 261120
    %v48 = vsel %vm47, %v43, 0.0
    %49 = vadd.xlane.f32.xlu0 %v48
    %v50 = vpop.xlane.xlu0 %49
    %v51 = vsel %vm47, %v44, 0.0
    %52 = vadd.xlane.f32.xlu0 %v51
    %v53 = vpop.xlane.xlu0 %52
    %v54 = vrcp.pop 32.0
    %v55 = vmul.f32 %v50, %v54
    %v56 = vmul.f32 %v53, %v54
    %v57 = vsub.f32 %v43, %v55
    %v58 = vsub.f32 %v44, %v56
    %v59 = vmul.f32 %v57, %v57
    %v60 = vmul.f32 %v58, %v58
    %v61 = vsel %vm47, %v59, 0.0
    %62 = vadd.xlane.f32.xlu0 %v61
    %v63 = vpop.xlane.xlu0 %62
    %v64 = vsel %vm47, %v60, 0.0
    %65 = vadd.xlane.f32.xlu0 %v64
    %v66 = vpop.xlane.xlu0 %65
    %v67 = vmul.f32 %v63, %v54
    %v68 = vmul.f32 %v66, %v54
    %v69 = vadd.f32 %v67, 1e-07
    %v70 = vadd.f32 %v68, 1e-07
    %v71 = vrsqrt.pop %v69
    %v72 = vrsqrt.pop %v70
    %v73 = vmul.f32 %v57, %v71
    %v74 = vmul.f32 %v58, %v72
    %v76 = vlaneseq
    %v77 = vshrl.u32 %v76, 7
    %v78 = vsub.s32 0, %v77
    %v79 = vrot.slane %v46, %v78
    %v81 = vadd.f32 %v73, %v79
    %v82 = vadd.f32 %v74, %v79
    %v84 = vlaneseq
    %v85 = vshrl.u32 %v84, 7
    %v86 = vsub.s32 0, %v85
    %v87 = vrot.slane %v45, %v86
    %v89 = vmul.f32 %v81, %v87
    %v90 = vmul.f32 %v82, %v87
    %v91 = vpack.c.bf16 %v90, %v89
    %v92 = vld [vmem:[%s3] sm:$0xf]
    %v93 = vld [vmem:[%s3 + $0x4] sm:$0xf]
    %v94 = vld [vmem:[%s3 + $0x8] sm:$0xf]
    %v95 = vld [vmem:[%s3 + $0xc] sm:$0xf]
    %v100 = vunpack.c.l.b16 %v92
    %v101 = vunpack.c.l.b16 %v93
    %v102 = vunpack.c.l.b16 %v94
    %v103 = vunpack.c.l.b16 %v95
    %v104 = vpack.c.b16 %v101, %v100
    %v105 = vpack.c.b16 %v103, %v102
    %v109 = vsel %vm47, %v91, 0
    %111 = vmatprep.subr.bf16.mxu0 0
    %112 = vmatpush1.bf16.msra.mxu0 %v104
    %113 = vmatprep.subr.bf16.mxu0 0
    %114 = vmatpush1.bf16.msra.mxu0 %v105
    %115 = vmatprep.subr.bf16.mxu0 0
    %116 = vmatpush1.bf16.msra.mxu0 0
    %117 = vmatprep.subr.bf16.mxu0 0
    %118 = vmatpush1.bf16.msra.mxu0 0
    %119 = vmatprep.subr.bf16.mxu0 0
    %120 = vmatpush1.bf16.msra.mxu0 0
    %121 = vmatprep.subr.bf16.mxu0 0
    %122 = vmatpush1.bf16.msra.mxu0 0
    %123 = vmatprep.subr.bf16.mxu0 0
    %124 = vmatpush1.bf16.msra.mxu0 0
    %125 = vmatprep.subr.bf16.mxu0 0
    %126 = vmatpush1.bf16.msra.mxu0 0
    %127 = vmatprep.subr.bf16.mxu0 0
    %128 = vmatpush1.bf16.msra.mxu0 0
    %129 = vmatprep.subr.bf16.mxu0 0
    %130 = vmatpush1.bf16.msra.mxu0 0
    %131 = vmatprep.subr.bf16.mxu0 0
    %132 = vmatpush1.bf16.msra.mxu0 0
    %133 = vmatprep.subr.bf16.mxu0 0
    %134 = vmatpush1.bf16.msra.mxu0 0
    %135 = vmatprep.subr.bf16.mxu0 0
    %136 = vmatpush1.bf16.msra.mxu0 0
    %137 = vmatprep.subr.bf16.mxu0 0
    %138 = vmatpush1.bf16.msra.mxu0 0
    %139 = vmatprep.subr.bf16.mxu0 0
    %140 = vmatpush1.bf16.msra.mxu0 0
    %141 = vmatprep.subr.bf16.mxu0 0
    %142 = vmatpush1.bf16.msra.mxu0 0
    %143 = vmatprep.mubr.bf16.mxu0 0
    %144 = vmatmul.mubr.bf16.gmra.mrb[0].mxu0 %v109
    %v145 = vpop.f32.mrb[0].mxu0
    %v146 = vadd.f32 0.0, %v145
    %v147 = vpop.f32.mrb[0].mxu0
    %v148 = vpop.f32.mrb[0].mxu0
    %v149 = vadd.f32 0.0, %v148
    %v150 = vpop.f32.mrb[0].mxu0
    %151 = vdwg.mxu0
    %v152 = vlaneseq
    %v153 = vshrl.u32 %v152, 7
    %v154 = vlaneseq
    %v155 = vand.u32 %v154, 127
    %vm156 = vcmp.ge.s32.totalorder %v153, %v155
    %v157 = vsel %vm156, 0.0, -1.7014117e+38
    %v158 = vpack.c.bf16 %v146, %v146
    %160 = vrot.lane.b32.xlu0 %v158, 96
    %v161 = vpop.permute.xlu0 %160
    %vm162 = vcmask 64512
    %v164 = vsel %vm162, %v158, 0
    %v167 = vsel %vm162, %v161, 0
    %169 = vmatprep.subr.bf16.mxu0 0
    %170 = vmatpush1.bf16.xpose.msra.mxu0 %v167
    %171 = vmatprep.subr.bf16.mxu0 0
    %172 = vmatpush1.bf16.xpose.msra.mxu0 0
    %173 = vmatprep.subr.bf16.mxu0 0
    %174 = vmatpush1.bf16.xpose.msra.mxu0 0
    %175 = vmatprep.subr.bf16.mxu0 0
    %176 = vmatpush1.bf16.xpose.msra.mxu0 0
    %177 = vmatprep.subr.bf16.mxu0 0
    %178 = vmatpush1.bf16.xpose.msra.mxu0 0
    %179 = vmatprep.subr.bf16.mxu0 0
    %180 = vmatpush1.bf16.xpose.msra.mxu0 0
    %181 = vmatprep.subr.bf16.mxu0 0
    %182 = vmatpush1.bf16.xpose.msra.mxu0 0
    %183 = vmatprep.subr.bf16.mxu0 0
    %184 = vmatpush1.bf16.xpose.msra.mxu0 0
    %185 = vmatprep.subr.bf16.mxu0 0
    %186 = vmatpush1.bf16.xpose.msra.mxu0 0
    %187 = vmatprep.subr.bf16.mxu0 0
    %188 = vmatpush1.bf16.xpose.msra.mxu0 0
    %189 = vmatprep.subr.bf16.mxu0 0
    %190 = vmatpush1.bf16.xpose.msra.mxu0 0
    %191 = vmatprep.subr.bf16.mxu0 0
    %192 = vmatpush1.bf16.xpose.msra.mxu0 0
    %193 = vmatprep.subr.bf16.mxu0 0
    %194 = vmatpush1.bf16.xpose.msra.mxu0 0
    %195 = vmatprep.subr.bf16.mxu0 0
    %196 = vmatpush1.bf16.xpose.msra.mxu0 0
    %197 = vmatprep.subr.bf16.mxu0 0
    %198 = vmatpush1.bf16.xpose.msra.mxu0 0
    %199 = vmatprep.subr.bf16.mxu0 0
    %200 = vmatpush1.bf16.xpose.msra.mxu0 0
    %201 = vmatprep.mubr.bf16.mxu0 0
    %202 = vmatmul.mubr.bf16.gmra.mrb[0].mxu0 %v164
    %v203 = vpop.f32.mrb[0].mxu0
    %v204 = vadd.f32 0.0, %v203
    %v205 = vpop.f32.mrb[0].mxu0
    %v206 = vpop.f32.mrb[0].mxu0
    %v207 = vpop.f32.mrb[0].mxu0
    %208 = vdwg.mxu0
    %v209 = vmul.f32 %v204, 0.35355338
    %v210 = vadd.f32 %v209, %v157
    %v211 = vsel %vm162, %v210, -inf
    %212 = vmax.xlane.f32.xlu0 %v211
    %v213 = vpop.xlane.xlu0 %212
    %v214 = vsub.f32 %v210, %v213
    %v215 = vmul.f32 %v214, 1.442695
    %v216 = vpow.pop %v215
    %v217 = vsel %vm162, %v216, 0.0
    %218 = vadd.xlane.f32.xlu0 %v217
    %v219 = vpop.xlane.xlu0 %218
    %v220 = vrcp.pop %v219
    %v221 = vmul.f32 %v216, %v220
    %v222 = vpack.c.bf16 %v221, %v221
    %223 = vrot.lane.b32.xlu0 %v158, 64
    %v224 = vpop.permute.xlu0 %223
    %v226 = vsel %vm162, %v222, 0
    %vm228 = vcmask 1043456
    %v230 = vsel %vm228, %v224, 0
    %232 = vmatprep.subr.bf16.mxu0 0
    %233 = vmatpush1.bf16.msra.mxu0 %v230
    %234 = vmatprep.subr.bf16.mxu0 0
    %235 = vmatpush1.bf16.msra.mxu0 0
    %236 = vmatprep.subr.bf16.mxu0 0
    %237 = vmatpush1.bf16.msra.mxu0 0
    %238 = vmatprep.subr.bf16.mxu0 0
    %239 = vmatpush1.bf16.msra.mxu0 0
    %240 = vmatprep.subr.bf16.mxu0 0
    %241 = vmatpush1.bf16.msra.mxu0 0
    %242 = vmatprep.subr.bf16.mxu0 0
    %243 = vmatpush1.bf16.msra.mxu0 0
    %244 = vmatprep.subr.bf16.mxu0 0
    %245 = vmatpush1.bf16.msra.mxu0 0
    %246 = vmatprep.subr.bf16.mxu0 0
    %247 = vmatpush1.bf16.msra.mxu0 0
    %248 = vmatprep.subr.bf16.mxu0 0
    %249 = vmatpush1.bf16.msra.mxu0 0
    %250 = vmatprep.subr.bf16.mxu0 0
    %251 = vmatpush1.bf16.msra.mxu0 0
    %252 = vmatprep.subr.bf16.mxu0 0
    %253 = vmatpush1.bf16.msra.mxu0 0
    %254 = vmatprep.subr.bf16.mxu0 0
    %255 = vmatpush1.bf16.msra.mxu0 0
    %256 = vmatprep.subr.bf16.mxu0 0
    %257 = vmatpush1.bf16.msra.mxu0 0
    %258 = vmatprep.subr.bf16.mxu0 0
    %259 = vmatpush1.bf16.msra.mxu0 0
    %260 = vmatprep.subr.bf16.mxu0 0
    %261 = vmatpush1.bf16.msra.mxu0 0
    %262 = vmatprep.subr.bf16.mxu0 0
    %263 = vmatpush1.bf16.msra.mxu0 0
    %264 = vmatprep.mubr.bf16.mxu0 0
    %265 = vmatmul.mubr.bf16.gmra.mrb[0].mxu0 %v226
    %v266 = vpop.f32.mrb[0].mxu0
    %v267 = vadd.f32 0.0, %v266
    %v268 = vpop.f32.mrb[0].mxu0
    %v269 = vpop.f32.mrb[0].mxu0
    %v270 = vpop.f32.mrb[0].mxu0
    %271 = vdwg.mxu0
    %v272 = vpack.c.bf16 %v267, %v267
    %v273 = vld [vmem:[%s4] sm:$0xf]
    %274 = vrot.lane.b32.xlu0 %v158, 120
    %v275 = vpop.permute.xlu0 %274
    %276 = vrot.lane.b32.xlu0 %v158, 88
    %v277 = vpop.permute.xlu0 %276
    %v279 = vsel %vm162, %v275, 0
    %v282 = vsel %vm162, %v277, 0
    %284 = vmatprep.subr.bf16.mxu0 0
    %285 = vmatpush1.bf16.xpose.msra.mxu0 %v282
    %286 = vmatprep.subr.bf16.mxu0 0
    %287 = vmatpush1.bf16.xpose.msra.mxu0 0
    %288 = vmatprep.subr.bf16.mxu0 0
    %289 = vmatpush1.bf16.xpose.msra.mxu0 0
    %290 = vmatprep.subr.bf16.mxu0 0
    %291 = vmatpush1.bf16.xpose.msra.mxu0 0
    %292 = vmatprep.subr.bf16.mxu0 0
    %293 = vmatpush1.bf16.xpose.msra.mxu0 0
    %294 = vmatprep.subr.bf16.mxu0 0
    %295 = vmatpush1.bf16.xpose.msra.mxu0 0
    %296 = vmatprep.subr.bf16.mxu0 0
    %297 = vmatpush1.bf16.xpose.msra.mxu0 0
    %298 = vmatprep.subr.bf16.mxu0 0
    %299 = vmatpush1.bf16.xpose.msra.mxu0 0
    %300 = vmatprep.subr.bf16.mxu0 0
    %301 = vmatpush1.bf16.xpose.msra.mxu0 0
    %302 = vmatprep.subr.bf16.mxu0 0
    %303 = vmatpush1.bf16.xpose.msra.mxu0 0
    %304 = vmatprep.subr.bf16.mxu0 0
    %305 = vmatpush1.bf16.xpose.msra.mxu0 0
    %306 = vmatprep.subr.bf16.mxu0 0
    %307 = vmatpush1.bf16.xpose.msra.mxu0 0
    %308 = vmatprep.subr.bf16.mxu0 0
    %309 = vmatpush1.bf16.xpose.msra.mxu0 0
    %310 = vmatprep.subr.bf16.mxu0 0
    %311 = vmatpush1.bf16.xpose.msra.mxu0 0
    %312 = vmatprep.subr.bf16.mxu0 0
    %313 = vmatpush1.bf16.xpose.msra.mxu0 0
    %314 = vmatprep.subr.bf16.mxu0 0
    %315 = vmatpush1.bf16.xpose.msra.mxu0 0
    %316 = vmatprep.mubr.bf16.mxu0 0
    %317 = vmatmul.mubr.bf16.gmra.mrb[0].mxu0 %v279
    %v318 = vpop.f32.mrb[0].mxu0
    %v319 = vadd.f32 0.0, %v318
    %v320 = vpop.f32.mrb[0].mxu0
    %v321 = vpop.f32.mrb[0].mxu0
    %v322 = vpop.f32.mrb[0].mxu0
    %323 = vdwg.mxu0
    %v324 = vmul.f32 %v319, 0.35355338
    %v325 = vadd.f32 %v324, %v157
    %v326 = vsel %vm162, %v325, -inf
    %327 = vmax.xlane.f32.xlu0 %v326
    %v328 = vpop.xlane.xlu0 %327
    %v329 = vsub.f32 %v325, %v328
    %v330 = vmul.f32 %v329, 1.442695
    %v331 = vpow.pop %v330
    %v332 = vsel %vm162, %v331, 0.0
    %333 = vadd.xlane.f32.xlu0 %v332
    %v334 = vpop.xlane.xlu0 %333
    %v335 = vrcp.pop %v334
    %v336 = vmul.f32 %v331, %v335
    %v337 = vpack.c.bf16 %v336, %v336
    %338 = vrot.lane.b32.xlu0 %v158, 56
    %v339 = vpop.permute.xlu0 %338
    %v341 = vsel %vm162, %v337, 0
    %v344 = vsel %vm228, %v339, 0
    %346 = vmatprep.subr.bf16.mxu0 0
    %347 = vmatpush1.bf16.msra.mxu0 %v344
    %348 = vmatprep.subr.bf16.mxu0 0
    %349 = vmatpush1.bf16.msra.mxu0 0
    %350 = vmatprep.subr.bf16.mxu0 0
    %351 = vmatpush1.bf16.msra.mxu0 0
    %352 = vmatprep.subr.bf16.mxu0 0
    %353 = vmatpush1.bf16.msra.mxu0 0
    %354 = vmatprep.subr.bf16.mxu0 0
    %355 = vmatpush1.bf16.msra.mxu0 0
    %356 = vmatprep.subr.bf16.mxu0 0
    %357 = vmatpush1.bf16.msra.mxu0 0
    %358 = vmatprep.subr.bf16.mxu0 0
    %359 = vmatpush1.bf16.msra.mxu0 0
    %360 = vmatprep.subr.bf16.mxu0 0
    %361 = vmatpush1.bf16.msra.mxu0 0
    %362 = vmatprep.subr.bf16.mxu0 0
    %363 = vmatpush1.bf16.msra.mxu0 0
    %364 = vmatprep.subr.bf16.mxu0 0
    %365 = vmatpush1.bf16.msra.mxu0 0
    %366 = vmatprep.subr.bf16.mxu0 0
    %367 = vmatpush1.bf16.msra.mxu0 0
    %368 = vmatprep.subr.bf16.mxu0 0
    %369 = vmatpush1.bf16.msra.mxu0 0
    %370 = vmatprep.subr.bf16.mxu0 0
    %371 = vmatpush1.bf16.msra.mxu0 0
    %372 = vmatprep.subr.bf16.mxu0 0
    %373 = vmatpush1.bf16.msra.mxu0 0
    %374 = vmatprep.subr.bf16.mxu0 0
    %375 = vmatpush1.bf16.msra.mxu0 0
    %376 = vmatprep.subr.bf16.mxu0 0
    %377 = vmatpush1.bf16.msra.mxu0 0
    %378 = vmatprep.mubr.bf16.mxu0 0
    %379 = vmatmul.mubr.bf16.gmra.mrb[0].mxu0 %v341
    %v380 = vpop.f32.mrb[0].mxu0
    %v381 = vadd.f32 0.0, %v380
    %v382 = vpop.f32.mrb[0].mxu0
    %v383 = vpop.f32.mrb[0].mxu0
    %v384 = vpop.f32.mrb[0].mxu0
    %385 = vdwg.mxu0
    %v386 = vpack.c.bf16 %v381, %v381
    %s387 = scalar_lea.vmem %s4, 4
    %v388 = vld [vmem:[%s387] sm:$0xf]
    %v390 = vsel %vm162, %v386, 0
    %v393 = vsel %vm228, %v388, 0
    %395 = vmatprep.subr.bf16.mxu0 0
    %396 = vmatpush1.bf16.msra.mxu0 %v393
    %397 = vmatprep.subr.bf16.mxu0 0
    %398 = vmatpush1.bf16.msra.mxu0 0
    %399 = vmatprep.subr.bf16.mxu0 0
    %400 = vmatpush1.bf16.msra.mxu0 0
    %401 = vmatprep.subr.bf16.mxu0 0
    %402 = vmatpush1.bf16.msra.mxu0 0
    %403 = vmatprep.subr.bf16.mxu0 0
    %404 = vmatpush1.bf16.msra.mxu0 0
    %405 = vmatprep.subr.bf16.mxu0 0
    %406 = vmatpush1.bf16.msra.mxu0 0
    %407 = vmatprep.subr.bf16.mxu0 0
    %408 = vmatpush1.bf16.msra.mxu0 0
    %409 = vmatprep.subr.bf16.mxu0 0
    %410 = vmatpush1.bf16.msra.mxu0 0
    %411 = vmatprep.subr.bf16.mxu0 0
    %412 = vmatpush1.bf16.msra.mxu0 0
    %413 = vmatprep.subr.bf16.mxu0 0
    %414 = vmatpush1.bf16.msra.mxu0 0
    %415 = vmatprep.subr.bf16.mxu0 0
    %416 = vmatpush1.bf16.msra.mxu0 0
    %417 = vmatprep.subr.bf16.mxu0 0
    %418 = vmatpush1.bf16.msra.mxu0 0
    %419 = vmatprep.subr.bf16.mxu0 0
    %420 = vmatpush1.bf16.msra.mxu0 0
    %421 = vmatprep.subr.bf16.mxu0 0
    %422 = vmatpush1.bf16.msra.mxu0 0
    %423 = vmatprep.subr.bf16.mxu0 0
    %424 = vmatpush1.bf16.msra.mxu0 0
    %425 = vmatprep.subr.bf16.mxu0 0
    %426 = vmatpush1.bf16.msra.mxu0 0
    %427 = vmatprep.mubr.bf16.mxu0 0
    %428 = vmatmul.mubr.bf16.gmra.mrb[0].mxu0 %v390
    %v429 = vpop.f32.mrb[0].mxu0
    %v430 = vadd.f32 0.0, %v429
    %v431 = vpop.f32.mrb[0].mxu0
    %v432 = vpop.f32.mrb[0].mxu0
    %v433 = vpop.f32.mrb[0].mxu0
    %434 = vdwg.mxu0
    %v436 = vsel %vm162, %v272, 0
    %v439 = vsel %vm228, %v273, 0
    %441 = vmatprep.subr.bf16.mxu0 0
    %442 = vmatpush1.bf16.msra.mxu0 %v439
    %443 = vmatprep.subr.bf16.mxu0 0
    %444 = vmatpush1.bf16.msra.mxu0 0
    %445 = vmatprep.subr.bf16.mxu0 0
    %446 = vmatpush1.bf16.msra.mxu0 0
    %447 = vmatprep.subr.bf16.mxu0 0
    %448 = vmatpush1.bf16.msra.mxu0 0
    %449 = vmatprep.subr.bf16.mxu0 0
    %450 = vmatpush1.bf16.msra.mxu0 0
    %451 = vmatprep.subr.bf16.mxu0 0
    %452 = vmatpush1.bf16.msra.mxu0 0
    %453 = vmatprep.subr.bf16.mxu0 0
    %454 = vmatpush1.bf16.msra.mxu0 0
    %455 = vmatprep.subr.bf16.mxu0 0
    %456 = vmatpush1.bf16.msra.mxu0 0
    %457 = vmatprep.subr.bf16.mxu0 0
    %458 = vmatpush1.bf16.msra.mxu0 0
    %459 = vmatprep.subr.bf16.mxu0 0
    %460 = vmatpush1.bf16.msra.mxu0 0
    %461 = vmatprep.subr.bf16.mxu0 0
    %462 = vmatpush1.bf16.msra.mxu0 0
    %463 = vmatprep.subr.bf16.mxu0 0
    %464 = vmatpush1.bf16.msra.mxu0 0
    %465 = vmatprep.subr.bf16.mxu0 0
    %466 = vmatpush1.bf16.msra.mxu0 0
    %467 = vmatprep.subr.bf16.mxu0 0
    %468 = vmatpush1.bf16.msra.mxu0 0
    %469 = vmatprep.subr.bf16.mxu0 0
    %470 = vmatpush1.bf16.msra.mxu0 0
    %471 = vmatprep.subr.bf16.mxu0 0
    %472 = vmatpush1.bf16.msra.mxu0 0
    %473 = vmatprep.mubr.bf16.mxu0 0
    %474 = vmatmul.mubr.bf16.gmra.mrb[0].mxu0 %v436
    %v475 = vpop.f32.mrb[0].mxu0
    %v476 = vadd.f32 %v430, %v475
    %v477 = vpop.f32.mrb[0].mxu0
    %v478 = vpop.f32.mrb[0].mxu0
    %v479 = vpop.f32.mrb[0].mxu0
    %480 = vdwg.mxu0
    %481 = vrot.lane.b32.xlu0 %v158, 112
    %v482 = vpop.permute.xlu0 %481
    %483 = vrot.lane.b32.xlu0 %v158, 80
    %v484 = vpop.permute.xlu0 %483
    %v486 = vsel %vm162, %v482, 0
    %v489 = vsel %vm162, %v484, 0
    %491 = vmatprep.subr.bf16.mxu0 0
    %492 = vmatpush1.bf16.xpose.msra.mxu0 %v489
    %493 = vmatprep.subr.bf16.mxu0 0
    %494 = vmatpush1.bf16.xpose.msra.mxu0 0
    %495 = vmatprep.subr.bf16.mxu0 0
    %496 = vmatpush1.bf16.xpose.msra.mxu0 0
    %497 = vmatprep.subr.bf16.mxu0 0
    %498 = vmatpush1.bf16.xpose.msra.mxu0 0
    %499 = vmatprep.subr.bf16.mxu0 0
    %500 = vmatpush1.bf16.xpose.msra.mxu0 0
    %501 = vmatprep.subr.bf16.mxu0 0
    %502 = vmatpush1.bf16.xpose.msra.mxu0 0
    %503 = vmatprep.subr.bf16.mxu0 0
    %504 = vmatpush1.bf16.xpose.msra.mxu0 0
    %505 = vmatprep.subr.bf16.mxu0 0
    %506 = vmatpush1.bf16.xpose.msra.mxu0 0
    %507 = vmatprep.subr.bf16.mxu0 0
    %508 = vmatpush1.bf16.xpose.msra.mxu0 0
    %509 = vmatprep.subr.bf16.mxu0 0
    %510 = vmatpush1.bf16.xpose.msra.mxu0 0
    %511 = vmatprep.subr.bf16.mxu0 0
    %512 = vmatpush1.bf16.xpose.msra.mxu0 0
    %513 = vmatprep.subr.bf16.mxu0 0
    %514 = vmatpush1.bf16.xpose.msra.mxu0 0
    %515 = vmatprep.subr.bf16.mxu0 0
    %516 = vmatpush1.bf16.xpose.msra.mxu0 0
    %517 = vmatprep.subr.bf16.mxu0 0
    %518 = vmatpush1.bf16.xpose.msra.mxu0 0
    %519 = vmatprep.subr.bf16.mxu0 0
    %520 = vmatpush1.bf16.xpose.msra.mxu0 0
    %521 = vmatprep.subr.bf16.mxu0 0
    %522 = vmatpush1.bf16.xpose.msra.mxu0 0
    %523 = vmatprep.mubr.bf16.mxu0 0
    %524 = vmatmul.mubr.bf16.gmra.mrb[0].mxu0 %v486
    %v525 = vpop.f32.mrb[0].mxu0
    %v526 = vadd.f32 0.0, %v525
    %v527 = vpop.f32.mrb[0].mxu0
    %v528 = vpop.f32.mrb[0].mxu0
    %v529 = vpop.f32.mrb[0].mxu0
    %530 = vdwg.mxu0
    %v531 = vmul.f32 %v526, 0.35355338
    %v532 = vadd.f32 %v531, %v157
    %v533 = vsel %vm162, %v532, -inf
    %534 = vmax.xlane.f32.xlu0 %v533
    %v535 = vpop.xlane.xlu0 %534
    %v536 = vsub.f32 %v532, %v535
    %v537 = vmul.f32 %v536, 1.442695
    %v538 = vpow.pop %v537
    %v539 = vsel %vm162, %v538, 0.0
    %540 = vadd.xlane.f32.xlu0 %v539
    %v541 = vpop.xlane.xlu0 %540
    %v542 = vrcp.pop %v541
    %v543 = vmul.f32 %v538, %v542
    %v544 = vpack.c.bf16 %v543, %v543
    %545 = vrot.lane.b32.xlu0 %v158, 48
    %v546 = vpop.permute.xlu0 %545
    %v548 = vsel %vm162, %v544, 0
    %v551 = vsel %vm228, %v546, 0
    %553 = vmatprep.subr.bf16.mxu0 0
    %554 = vmatpush1.bf16.msra.mxu0 %v551
    %555 = vmatprep.subr.bf16.mxu0 0
    %556 = vmatpush1.bf16.msra.mxu0 0
    %557 = vmatprep.subr.bf16.mxu0 0
    %558 = vmatpush1.bf16.msra.mxu0 0
    %559 = vmatprep.subr.bf16.mxu0 0
    %560 = vmatpush1.bf16.msra.mxu0 0
    %561 = vmatprep.subr.bf16.mxu0 0
    %562 = vmatpush1.bf16.msra.mxu0 0
    %563 = vmatprep.subr.bf16.mxu0 0
    %564 = vmatpush1.bf16.msra.mxu0 0
    %565 = vmatprep.subr.bf16.mxu0 0
    %566 = vmatpush1.bf16.msra.mxu0 0
    %567 = vmatprep.subr.bf16.mxu0 0
    %568 = vmatpush1.bf16.msra.mxu0 0
    %569 = vmatprep.subr.bf16.mxu0 0
    %570 = vmatpush1.bf16.msra.mxu0 0
    %571 = vmatprep.subr.bf16.mxu0 0
    %572 = vmatpush1.bf16.msra.mxu0 0
    %573 = vmatprep.subr.bf16.mxu0 0
    %574 = vmatpush1.bf16.msra.mxu0 0
    %575 = vmatprep.subr.bf16.mxu0 0
    %576 = vmatpush1.bf16.msra.mxu0 0
    %577 = vmatprep.subr.bf16.mxu0 0
    %578 = vmatpush1.bf16.msra.mxu0 0
    %579 = vmatprep.subr.bf16.mxu0 0
    %580 = vmatpush1.bf16.msra.mxu0 0
    %581 = vmatprep.subr.bf16.mxu0 0
    %582 = vmatpush1.bf16.msra.mxu0 0
    %583 = vmatprep.subr.bf16.mxu0 0
    %584 = vmatpush1.bf16.msra.mxu0 0
    %585 = vmatprep.mubr.bf16.mxu0 0
    %586 = vmatmul.mubr.bf16.gmra.mrb[0].mxu0 %v548
    %v587 = vpop.f32.mrb[0].mxu0
    %v588 = vadd.f32 0.0, %v587
    %v589 = vpop.f32.mrb[0].mxu0
    %v590 = vpop.f32.mrb[0].mxu0
    %v591 = vpop.f32.mrb[0].mxu0
    %592 = vdwg.mxu0
    %v593 = vpack.c.bf16 %v588, %v588
    %s594 = scalar_lea.vmem %s4, 8
    %v595 = vld [vmem:[%s594] sm:$0xf]
    %v597 = vsel %vm162, %v593, 0
    %v600 = vsel %vm228, %v595, 0
    %602 = vmatprep.subr.bf16.mxu0 0
    %603 = vmatpush1.bf16.msra.mxu0 %v600
    %604 = vmatprep.subr.bf16.mxu0 0
    %605 = vmatpush1.bf16.msra.mxu0 0
    %606 = vmatprep.subr.bf16.mxu0 0
    %607 = vmatpush1.bf16.msra.mxu0 0
    %608 = vmatprep.subr.bf16.mxu0 0
    %609 = vmatpush1.bf16.msra.mxu0 0
    %610 = vmatprep.subr.bf16.mxu0 0
    %611 = vmatpush1.bf16.msra.mxu0 0
    %612 = vmatprep.subr.bf16.mxu0 0
    %613 = vmatpush1.bf16.msra.mxu0 0
    %614 = vmatprep.subr.bf16.mxu0 0
    %615 = vmatpush1.bf16.msra.mxu0 0
    %616 = vmatprep.subr.bf16.mxu0 0
    %617 = vmatpush1.bf16.msra.mxu0 0
    %618 = vmatprep.subr.bf16.mxu0 0
    %619 = vmatpush1.bf16.msra.mxu0 0
    %620 = vmatprep.subr.bf16.mxu0 0
    %621 = vmatpush1.bf16.msra.mxu0 0
    %622 = vmatprep.subr.bf16.mxu0 0
    %623 = vmatpush1.bf16.msra.mxu0 0
    %624 = vmatprep.subr.bf16.mxu0 0
    %625 = vmatpush1.bf16.msra.mxu0 0
    %626 = vmatprep.subr.bf16.mxu0 0
    %627 = vmatpush1.bf16.msra.mxu0 0
    %628 = vmatprep.subr.bf16.mxu0 0
    %629 = vmatpush1.bf16.msra.mxu0 0
    %630 = vmatprep.subr.bf16.mxu0 0
    %631 = vmatpush1.bf16.msra.mxu0 0
    %632 = vmatprep.subr.bf16.mxu0 0
    %633 = vmatpush1.bf16.msra.mxu0 0
    %634 = vmatprep.mubr.bf16.mxu0 0
    %635 = vmatmul.mubr.bf16.gmra.mrb[0].mxu0 %v597
    %v636 = vpop.f32.mrb[0].mxu0
    %v637 = vadd.f32 0.0, %v636
    %v638 = vpop.f32.mrb[0].mxu0
    %v639 = vpop.f32.mrb[0].mxu0
    %v640 = vpop.f32.mrb[0].mxu0
    %641 = vdwg.mxu0
    %v642 = vadd.f32 %v476, %v637
    %643 = vrot.lane.b32.xlu0 %v158, 104
    %v644 = vpop.permute.xlu0 %643
    %645 = vrot.lane.b32.xlu0 %v158, 72
    %v646 = vpop.permute.xlu0 %645
    %v648 = vsel %vm162, %v644, 0
    %v651 = vsel %vm162, %v646, 0
    %653 = vmatprep.subr.bf16.mxu0 0
    %654 = vmatpush1.bf16.xpose.msra.mxu0 %v651
    %655 = vmatprep.subr.bf16.mxu0 0
    %656 = vmatpush1.bf16.xpose.msra.mxu0 0
    %657 = vmatprep.subr.bf16.mxu0 0
    %658 = vmatpush1.bf16.xpose.msra.mxu0 0
    %659 = vmatprep.subr.bf16.mxu0 0
    %660 = vmatpush1.bf16.xpose.msra.mxu0 0
    %661 = vmatprep.subr.bf16.mxu0 0
    %662 = vmatpush1.bf16.xpose.msra.mxu0 0
    %663 = vmatprep.subr.bf16.mxu0 0
    %664 = vmatpush1.bf16.xpose.msra.mxu0 0
    %665 = vmatprep.subr.bf16.mxu0 0
    %666 = vmatpush1.bf16.xpose.msra.mxu0 0
    %667 = vmatprep.subr.bf16.mxu0 0
    %668 = vmatpush1.bf16.xpose.msra.mxu0 0
    %669 = vmatprep.subr.bf16.mxu0 0
    %670 = vmatpush1.bf16.xpose.msra.mxu0 0
    %671 = vmatprep.subr.bf16.mxu0 0
    %672 = vmatpush1.bf16.xpose.msra.mxu0 0
    %673 = vmatprep.subr.bf16.mxu0 0
    %674 = vmatpush1.bf16.xpose.msra.mxu0 0
    %675 = vmatprep.subr.bf16.mxu0 0
    %676 = vmatpush1.bf16.xpose.msra.mxu0 0
    %677 = vmatprep.subr.bf16.mxu0 0
    %678 = vmatpush1.bf16.xpose.msra.mxu0 0
    %679 = vmatprep.subr.bf16.mxu0 0
    %680 = vmatpush1.bf16.xpose.msra.mxu0 0
    %681 = vmatprep.subr.bf16.mxu0 0
    %682 = vmatpush1.bf16.xpose.msra.mxu0 0
    %683 = vmatprep.subr.bf16.mxu0 0
    %684 = vmatpush1.bf16.xpose.msra.mxu0 0
    %685 = vmatprep.mubr.bf16.mxu0 0
    %686 = vmatmul.mubr.bf16.gmra.mrb[0].mxu0 %v648
    %v687 = vpop.f32.mrb[0].mxu0
    %v688 = vadd.f32 0.0, %v687
    %v689 = vpop.f32.mrb[0].mxu0
    %v690 = vpop.f32.mrb[0].mxu0
    %v691 = vpop.f32.mrb[0].mxu0
    %692 = vdwg.mxu0
    %v693 = vmul.f32 %v688, 0.35355338
    %v694 = vadd.f32 %v693, %v157
    %v695 = vsel %vm162, %v694, -inf
    %696 = vmax.xlane.f32.xlu0 %v695
    %v697 = vpop.xlane.xlu0 %696
    %v698 = vsub.f32 %v694, %v697
    %v699 = vmul.f32 %v698, 1.442695
    %v700 = vpow.pop %v699
    %v701 = vsel %vm162, %v700, 0.0
    %702 = vadd.xlane.f32.xlu0 %v701
    %v703 = vpop.xlane.xlu0 %702
    %v704 = vrcp.pop %v703
    %v705 = vmul.f32 %v700, %v704
    %v706 = vpack.c.bf16 %v705, %v705
    %707 = vrot.lane.b32.xlu0 %v158, 40
    %v708 = vpop.permute.xlu0 %707
    %v710 = vsel %vm162, %v706, 0
    %v713 = vsel %vm228, %v708, 0
    %715 = vmatprep.subr.bf16.mxu0 0
    %716 = vmatpush1.bf16.msra.mxu0 %v713
    %717 = vmatprep.subr.bf16.mxu0 0
    %718 = vmatpush1.bf16.msra.mxu0 0
    %719 = vmatprep.subr.bf16.mxu0 0
    %720 = vmatpush1.bf16.msra.mxu0 0
    %721 = vmatprep.subr.bf16.mxu0 0
    %722 = vmatpush1.bf16.msra.mxu0 0
    %723 = vmatprep.subr.bf16.mxu0 0
    %724 = vmatpush1.bf16.msra.mxu0 0
    %725 = vmatprep.subr.bf16.mxu0 0
    %726 = vmatpush1.bf16.msra.mxu0 0
    %727 = vmatprep.subr.bf16.mxu0 0
    %728 = vmatpush1.bf16.msra.mxu0 0
    %729 = vmatprep.subr.bf16.mxu0 0
    %730 = vmatpush1.bf16.msra.mxu0 0
    %731 = vmatprep.subr.bf16.mxu0 0
    %732 = vmatpush1.bf16.msra.mxu0 0
    %733 = vmatprep.subr.bf16.mxu0 0
    %734 = vmatpush1.bf16.msra.mxu0 0
    %735 = vmatprep.subr.bf16.mxu0 0
    %736 = vmatpush1.bf16.msra.mxu0 0
    %737 = vmatprep.subr.bf16.mxu0 0
    %738 = vmatpush1.bf16.msra.mxu0 0
    %739 = vmatprep.subr.bf16.mxu0 0
    %740 = vmatpush1.bf16.msra.mxu0 0
    %741 = vmatprep.subr.bf16.mxu0 0
    %742 = vmatpush1.bf16.msra.mxu0 0
    %743 = vmatprep.subr.bf16.mxu0 0
    %744 = vmatpush1.bf16.msra.mxu0 0
    %745 = vmatprep.subr.bf16.mxu0 0
    %746 = vmatpush1.bf16.msra.mxu0 0
    %747 = vmatprep.mubr.bf16.mxu0 0
    %748 = vmatmul.mubr.bf16.gmra.mrb[0].mxu0 %v710
    %v749 = vpop.f32.mrb[0].mxu0
    %v750 = vadd.f32 0.0, %v749
    %v751 = vpop.f32.mrb[0].mxu0
    %v752 = vpop.f32.mrb[0].mxu0
    %v753 = vpop.f32.mrb[0].mxu0
    %754 = vdwg.mxu0
    %v755 = vpack.c.bf16 %v750, %v750
    %s756 = scalar_lea.vmem %s4, 12
    %v757 = vld [vmem:[%s756] sm:$0xf]
    %v759 = vsel %vm162, %v755, 0
    %v762 = vsel %vm228, %v757, 0
    %764 = vmatprep.subr.bf16.mxu0 0
    %765 = vmatpush1.bf16.msra.mxu0 %v762
    %766 = vmatprep.subr.bf16.mxu0 0
    %767 = vmatpush1.bf16.msra.mxu0 0
    %768 = vmatprep.subr.bf16.mxu0 0
    %769 = vmatpush1.bf16.msra.mxu0 0
    %770 = vmatprep.subr.bf16.mxu0 0
    %771 = vmatpush1.bf16.msra.mxu0 0
    %772 = vmatprep.subr.bf16.mxu0 0
    %773 = vmatpush1.bf16.msra.mxu0 0
    %774 = vmatprep.subr.bf16.mxu0 0
    %775 = vmatpush1.bf16.msra.mxu0 0
    %776 = vmatprep.subr.bf16.mxu0 0
    %777 = vmatpush1.bf16.msra.mxu0 0
    %778 = vmatprep.subr.bf16.mxu0 0
    %779 = vmatpush1.bf16.msra.mxu0 0
    %780 = vmatprep.subr.bf16.mxu0 0
    %781 = vmatpush1.bf16.msra.mxu0 0
    %782 = vmatprep.subr.bf16.mxu0 0
    %783 = vmatpush1.bf16.msra.mxu0 0
    %784 = vmatprep.subr.bf16.mxu0 0
    %785 = vmatpush1.bf16.msra.mxu0 0
    %786 = vmatprep.subr.bf16.mxu0 0
    %787 = vmatpush1.bf16.msra.mxu0 0
    %788 = vmatprep.subr.bf16.mxu0 0
    %789 = vmatpush1.bf16.msra.mxu0 0
    %790 = vmatprep.subr.bf16.mxu0 0
    %791 = vmatpush1.bf16.msra.mxu0 0
    %792 = vmatprep.subr.bf16.mxu0 0
    %793 = vmatpush1.bf16.msra.mxu0 0
    %794 = vmatprep.subr.bf16.mxu0 0
    %795 = vmatpush1.bf16.msra.mxu0 0
    %796 = vmatprep.mubr.bf16.mxu0 0
    %797 = vmatmul.mubr.bf16.gmra.mrb[0].mxu0 %v759
    %v798 = vpop.f32.mrb[0].mxu0
    %v799 = vadd.f32 0.0, %v798
    %v800 = vpop.f32.mrb[0].mxu0
    %v801 = vpop.f32.mrb[0].mxu0
    %v802 = vpop.f32.mrb[0].mxu0
    %803 = vdwg.mxu0
    %v804 = vadd.f32 %v642, %v799
    %v805 = vpack.c.bf16 %v149, %v149
    %807 = vrot.lane.b32.xlu0 %v805, 96
    %v808 = vpop.permute.xlu0 %807
    %v810 = vsel %vm162, %v805, 0
    %v813 = vsel %vm162, %v808, 0
    %815 = vmatprep.subr.bf16.mxu0 0
    %816 = vmatpush1.bf16.xpose.msra.mxu0 %v813
    %817 = vmatprep.subr.bf16.mxu0 0
    %818 = vmatpush1.bf16.xpose.msra.mxu0 0
    %819 = vmatprep.subr.bf16.mxu0 0
    %820 = vmatpush1.bf16.xpose.msra.mxu0 0
    %821 = vmatprep.subr.bf16.mxu0 0
    %822 = vmatpush1.bf16.xpose.msra.mxu0 0
    %823 = vmatprep.subr.bf16.mxu0 0
    %824 = vmatpush1.bf16.xpose.msra.mxu0 0
    %825 = vmatprep.subr.bf16.mxu0 0
    %826 = vmatpush1.bf16.xpose.msra.mxu0 0
    %827 = vmatprep.subr.bf16.mxu0 0
    %828 = vmatpush1.bf16.xpose.msra.mxu0 0
    %829 = vmatprep.subr.bf16.mxu0 0
    %830 = vmatpush1.bf16.xpose.msra.mxu0 0
    %831 = vmatprep.subr.bf16.mxu0 0
    %832 = vmatpush1.bf16.xpose.msra.mxu0 0
    %833 = vmatprep.subr.bf16.mxu0 0
    %834 = vmatpush1.bf16.xpose.msra.mxu0 0
    %835 = vmatprep.subr.bf16.mxu0 0
    %836 = vmatpush1.bf16.xpose.msra.mxu0 0
    %837 = vmatprep.subr.bf16.mxu0 0
    %838 = vmatpush1.bf16.xpose.msra.mxu0 0
    %839 = vmatprep.subr.bf16.mxu0 0
    %840 = vmatpush1.bf16.xpose.msra.mxu0 0
    %841 = vmatprep.subr.bf16.mxu0 0
    %842 = vmatpush1.bf16.xpose.msra.mxu0 0
    %843 = vmatprep.subr.bf16.mxu0 0
    %844 = vmatpush1.bf16.xpose.msra.mxu0 0
    %845 = vmatprep.subr.bf16.mxu0 0
    %846 = vmatpush1.bf16.xpose.msra.mxu0 0
    %847 = vmatprep.mubr.bf16.mxu0 0
    %848 = vmatmul.mubr.bf16.gmra.mrb[0].mxu0 %v810
    %v849 = vpop.f32.mrb[0].mxu0
    %v850 = vadd.f32 0.0, %v849
    %v851 = vpop.f32.mrb[0].mxu0
    %v852 = vpop.f32.mrb[0].mxu0
    %v853 = vpop.f32.mrb[0].mxu0
    %854 = vdwg.mxu0
    %v855 = vmul.f32 %v850, 0.35355338
    %v856 = vadd.f32 %v855, %v157
    %v857 = vsel %vm162, %v856, -inf
    %858 = vmax.xlane.f32.xlu0 %v857
    %v859 = vpop.xlane.xlu0 %858
    %v860 = vsub.f32 %v856, %v859
    %v861 = vmul.f32 %v860, 1.442695
    %v862 = vpow.pop %v861
    %v863 = vsel %vm162, %v862, 0.0
    %864 = vadd.xlane.f32.xlu0 %v863
    %v865 = vpop.xlane.xlu0 %864
    %v866 = vrcp.pop %v865
    %v867 = vmul.f32 %v862, %v866
    %v868 = vpack.c.bf16 %v867, %v867
    %869 = vrot.lane.b32.xlu0 %v805, 64
    %v870 = vpop.permute.xlu0 %869
    %v872 = vsel %vm162, %v868, 0
    %v875 = vsel %vm228, %v870, 0
    %877 = vmatprep.subr.bf16.mxu0 0
    %878 = vmatpush1.bf16.msra.mxu0 %v875
    %879 = vmatprep.subr.bf16.mxu0 0
    %880 = vmatpush1.bf16.msra.mxu0 0
    %881 = vmatprep.subr.bf16.mxu0 0
    %882 = vmatpush1.bf16.msra.mxu0 0
    %883 = vmatprep.subr.bf16.mxu0 0
    %884 = vmatpush1.bf16.msra.mxu0 0
    %885 = vmatprep.subr.bf16.mxu0 0
    %886 = vmatpush1.bf16.msra.mxu0 0
    %887 = vmatprep.subr.bf16.mxu0 0
    %888 = vmatpush1.bf16.msra.mxu0 0
    %889 = vmatprep.subr.bf16.mxu0 0
    %890 = vmatpush1.bf16.msra.mxu0 0
    %891 = vmatprep.subr.bf16.mxu0 0
    %892 = vmatpush1.bf16.msra.mxu0 0
    %893 = vmatprep.subr.bf16.mxu0 0
    %894 = vmatpush1.bf16.msra.mxu0 0
    %895 = vmatprep.subr.bf16.mxu0 0
    %896 = vmatpush1.bf16.msra.mxu0 0
    %897 = vmatprep.subr.bf16.mxu0 0
    %898 = vmatpush1.bf16.msra.mxu0 0
    %899 = vmatprep.subr.bf16.mxu0 0
    %900 = vmatpush1.bf16.msra.mxu0 0
    %901 = vmatprep.subr.bf16.mxu0 0
    %902 = vmatpush1.bf16.msra.mxu0 0
    %903 = vmatprep.subr.bf16.mxu0 0
    %904 = vmatpush1.bf16.msra.mxu0 0
    %905 = vmatprep.subr.bf16.mxu0 0
    %906 = vmatpush1.bf16.msra.mxu0 0
    %907 = vmatprep.subr.bf16.mxu0 0
    %908 = vmatpush1.bf16.msra.mxu0 0
    %909 = vmatprep.mubr.bf16.mxu0 0
    %910 = vmatmul.mubr.bf16.gmra.mrb[0].mxu0 %v872
    %v911 = vpop.f32.mrb[0].mxu0
    %v912 = vadd.f32 0.0, %v911
    %v913 = vpop.f32.mrb[0].mxu0
    %v914 = vpop.f32.mrb[0].mxu0
    %v915 = vpop.f32.mrb[0].mxu0
    %916 = vdwg.mxu0
    %v917 = vpack.c.bf16 %v912, %v912
    %918 = vrot.lane.b32.xlu0 %v805, 120
    %v919 = vpop.permute.xlu0 %918
    %920 = vrot.lane.b32.xlu0 %v805, 88
    %v921 = vpop.permute.xlu0 %920
    %v923 = vsel %vm162, %v919, 0
    %v926 = vsel %vm162, %v921, 0
    %928 = vmatprep.subr.bf16.mxu0 0
    %929 = vmatpush1.bf16.xpose.msra.mxu0 %v926
    %930 = vmatprep.subr.bf16.mxu0 0
    %931 = vmatpush1.bf16.xpose.msra.mxu0 0
    %932 = vmatprep.subr.bf16.mxu0 0
    %933 = vmatpush1.bf16.xpose.msra.mxu0 0
    %934 = vmatprep.subr.bf16.mxu0 0
    %935 = vmatpush1.bf16.xpose.msra.mxu0 0
    %936 = vmatprep.subr.bf16.mxu0 0
    %937 = vmatpush1.bf16.xpose.msra.mxu0 0
    %938 = vmatprep.subr.bf16.mxu0 0
    %939 = vmatpush1.bf16.xpose.msra.mxu0 0
    %940 = vmatprep.subr.bf16.mxu0 0
    %941 = vmatpush1.bf16.xpose.msra.mxu0 0
    %942 = vmatprep.subr.bf16.mxu0 0
    %943 = vmatpush1.bf16.xpose.msra.mxu0 0
    %944 = vmatprep.subr.bf16.mxu0 0
    %945 = vmatpush1.bf16.xpose.msra.mxu0 0
    %946 = vmatprep.subr.bf16.mxu0 0
    %947 = vmatpush1.bf16.xpose.msra.mxu0 0
    %948 = vmatprep.subr.bf16.mxu0 0
    %949 = vmatpush1.bf16.xpose.msra.mxu0 0
    %950 = vmatprep.subr.bf16.mxu0 0
    %951 = vmatpush1.bf16.xpose.msra.mxu0 0
    %952 = vmatprep.subr.bf16.mxu0 0
    %953 = vmatpush1.bf16.xpose.msra.mxu0 0
    %954 = vmatprep.subr.bf16.mxu0 0
    %955 = vmatpush1.bf16.xpose.msra.mxu0 0
    %956 = vmatprep.subr.bf16.mxu0 0
    %957 = vmatpush1.bf16.xpose.msra.mxu0 0
    %958 = vmatprep.subr.bf16.mxu0 0
    %959 = vmatpush1.bf16.xpose.msra.mxu0 0
    %960 = vmatprep.mubr.bf16.mxu0 0
    %961 = vmatmul.mubr.bf16.gmra.mrb[0].mxu0 %v923
    %v962 = vpop.f32.mrb[0].mxu0
    %v963 = vadd.f32 0.0, %v962
    %v964 = vpop.f32.mrb[0].mxu0
    %v965 = vpop.f32.mrb[0].mxu0
    %v966 = vpop.f32.mrb[0].mxu0
    %967 = vdwg.mxu0
    %v968 = vmul.f32 %v963, 0.35355338
    %v969 = vadd.f32 %v968, %v157
    %v970 = vsel %vm162, %v969, -inf
    %971 = vmax.xlane.f32.xlu0 %v970
    %v972 = vpop.xlane.xlu0 %971
    %v973 = vsub.f32 %v969, %v972
    %v974 = vmul.f32 %v973, 1.442695
    %v975 = vpow.pop %v974
    %v976 = vsel %vm162, %v975, 0.0
    %977 = vadd.xlane.f32.xlu0 %v976
    %v978 = vpop.xlane.xlu0 %977
    %v979 = vrcp.pop %v978
    %v980 = vmul.f32 %v975, %v979
    %v981 = vpack.c.bf16 %v980, %v980
    %982 = vrot.lane.b32.xlu0 %v805, 56
    %v983 = vpop.permute.xlu0 %982
    %v985 = vsel %vm162, %v981, 0
    %v988 = vsel %vm228, %v983, 0
    %990 = vmatprep.subr.bf16.mxu0 0
    %991 = vmatpush1.bf16.msra.mxu0 %v988
    %992 = vmatprep.subr.bf16.mxu0 0
    %993 = vmatpush1.bf16.msra.mxu0 0
    %994 = vmatprep.subr.bf16.mxu0 0
    %995 = vmatpush1.bf16.msra.mxu0 0
    %996 = vmatprep.subr.bf16.mxu0 0
    %997 = vmatpush1.bf16.msra.mxu0 0
    %998 = vmatprep.subr.bf16.mxu0 0
    %999 = vmatpush1.bf16.msra.mxu0 0
    %1000 = vmatprep.subr.bf16.mxu0 0
    %1001 = vmatpush1.bf16.msra.mxu0 0
    %1002 = vmatprep.subr.bf16.mxu0 0
    %1003 = vmatpush1.bf16.msra.mxu0 0
    %1004 = vmatprep.subr.bf16.mxu0 0
    %1005 = vmatpush1.bf16.msra.mxu0 0
    %1006 = vmatprep.subr.bf16.mxu0 0
    %1007 = vmatpush1.bf16.msra.mxu0 0
    %1008 = vmatprep.subr.bf16.mxu0 0
    %1009 = vmatpush1.bf16.msra.mxu0 0
    %1010 = vmatprep.subr.bf16.mxu0 0
    %1011 = vmatpush1.bf16.msra.mxu0 0
    %1012 = vmatprep.subr.bf16.mxu0 0
    %1013 = vmatpush1.bf16.msra.mxu0 0
    %1014 = vmatprep.subr.bf16.mxu0 0
    %1015 = vmatpush1.bf16.msra.mxu0 0
    %1016 = vmatprep.subr.bf16.mxu0 0
    %1017 = vmatpush1.bf16.msra.mxu0 0
    %1018 = vmatprep.subr.bf16.mxu0 0
    %1019 = vmatpush1.bf16.msra.mxu0 0
    %1020 = vmatprep.subr.bf16.mxu0 0
    %1021 = vmatpush1.bf16.msra.mxu0 0
    %1022 = vmatprep.mubr.bf16.mxu0 0
    %1023 = vmatmul.mubr.bf16.gmra.mrb[0].mxu0 %v985
    %v1024 = vpop.f32.mrb[0].mxu0
    %v1025 = vadd.f32 0.0, %v1024
    %v1026 = vpop.f32.mrb[0].mxu0
    %v1027 = vpop.f32.mrb[0].mxu0
    %v1028 = vpop.f32.mrb[0].mxu0
    %1029 = vdwg.mxu0
    %v1030 = vpack.c.bf16 %v1025, %v1025
    %v1032 = vsel %vm162, %v1030, 0
    %1034 = vmatprep.subr.bf16.mxu0 0
    %1035 = vmatpush1.bf16.msra.mxu0 %v393
    %1036 = vmatprep.subr.bf16.mxu0 0
    %1037 = vmatpush1.bf16.msra.mxu0 0
    %1038 = vmatprep.subr.bf16.mxu0 0
    %1039 = vmatpush1.bf16.msra.mxu0 0
    %1040 = vmatprep.subr.bf16.mxu0 0
    %1041 = vmatpush1.bf16.msra.mxu0 0
    %1042 = vmatprep.subr.bf16.mxu0 0
    %1043 = vmatpush1.bf16.msra.mxu0 0
    %1044 = vmatprep.subr.bf16.mxu0 0
    %1045 = vmatpush1.bf16.msra.mxu0 0
    %1046 = vmatprep.subr.bf16.mxu0 0
    %1047 = vmatpush1.bf16.msra.mxu0 0
    %1048 = vmatprep.subr.bf16.mxu0 0
    %1049 = vmatpush1.bf16.msra.mxu0 0
    %1050 = vmatprep.subr.bf16.mxu0 0
    %1051 = vmatpush1.bf16.msra.mxu0 0
    %1052 = vmatprep.subr.bf16.mxu0 0
    %1053 = vmatpush1.bf16.msra.mxu0 0
    %1054 = vmatprep.subr.bf16.mxu0 0
    %1055 = vmatpush1.bf16.msra.mxu0 0
    %1056 = vmatprep.subr.bf16.mxu0 0
    %1057 = vmatpush1.bf16.msra.mxu0 0
    %1058 = vmatprep.subr.bf16.mxu0 0
    %1059 = vmatpush1.bf16.msra.mxu0 0
    %1060 = vmatprep.subr.bf16.mxu0 0
    %1061 = vmatpush1.bf16.msra.mxu0 0
    %1062 = vmatprep.subr.bf16.mxu0 0
    %1063 = vmatpush1.bf16.msra.mxu0 0
    %1064 = vmatprep.subr.bf16.mxu0 0
    %1065 = vmatpush1.bf16.msra.mxu0 0
    %1066 = vmatprep.mubr.bf16.mxu0 0
    %1067 = vmatmul.mubr.bf16.gmra.mrb[0].mxu0 %v1032
    %v1068 = vpop.f32.mrb[0].mxu0
    %v1069 = vadd.f32 0.0, %v1068
    %v1070 = vpop.f32.mrb[0].mxu0
    %v1071 = vpop.f32.mrb[0].mxu0
    %v1072 = vpop.f32.mrb[0].mxu0
    %1073 = vdwg.mxu0
    %v1075 = vsel %vm162, %v917, 0
    %1077 = vmatprep.subr.bf16.mxu0 0
    %1078 = vmatpush1.bf16.msra.mxu0 %v439
    %1079 = vmatprep.subr.bf16.mxu0 0
    %1080 = vmatpush1.bf16.msra.mxu0 0
    %1081 = vmatprep.subr.bf16.mxu0 0
    %1082 = vmatpush1.bf16.msra.mxu0 0
    %1083 = vmatprep.subr.bf16.mxu0 0
    %1084 = vmatpush1.bf16.msra.mxu0 0
    %1085 = vmatprep.subr.bf16.mxu0 0
    %1086 = vmatpush1.bf16.msra.mxu0 0
    %1087 = vmatprep.subr.bf16.mxu0 0
    %1088 = vmatpush1.bf16.msra.mxu0 0
    %1089 = vmatprep.subr.bf16.mxu0 0
    %1090 = vmatpush1.bf16.msra.mxu0 0
    %1091 = vmatprep.subr.bf16.mxu0 0
    %1092 = vmatpush1.bf16.msra.mxu0 0
    %1093 = vmatprep.subr.bf16.mxu0 0
    %1094 = vmatpush1.bf16.msra.mxu0 0
    %1095 = vmatprep.subr.bf16.mxu0 0
    %1096 = vmatpush1.bf16.msra.mxu0 0
    %1097 = vmatprep.subr.bf16.mxu0 0
    %1098 = vmatpush1.bf16.msra.mxu0 0
    %1099 = vmatprep.subr.bf16.mxu0 0
    %1100 = vmatpush1.bf16.msra.mxu0 0
    %1101 = vmatprep.subr.bf16.mxu0 0
    %1102 = vmatpush1.bf16.msra.mxu0 0
    %1103 = vmatprep.subr.bf16.mxu0 0
    %1104 = vmatpush1.bf16.msra.mxu0 0
    %1105 = vmatprep.subr.bf16.mxu0 0
    %1106 = vmatpush1.bf16.msra.mxu0 0
    %1107 = vmatprep.subr.bf16.mxu0 0
    %1108 = vmatpush1.bf16.msra.mxu0 0
    %1109 = vmatprep.mubr.bf16.mxu0 0
    %1110 = vmatmul.mubr.bf16.gmra.mrb[0].mxu0 %v1075
    %v1111 = vpop.f32.mrb[0].mxu0
    %v1112 = vadd.f32 %v1069, %v1111
    %v1113 = vpop.f32.mrb[0].mxu0
    %v1114 = vpop.f32.mrb[0].mxu0
    %v1115 = vpop.f32.mrb[0].mxu0
    %1116 = vdwg.mxu0
    %1117 = vrot.lane.b32.xlu0 %v805, 112
    %v1118 = vpop.permute.xlu0 %1117
    %1119 = vrot.lane.b32.xlu0 %v805, 80
    %v1120 = vpop.permute.xlu0 %1119
    %v1122 = vsel %vm162, %v1118, 0
    %v1125 = vsel %vm162, %v1120, 0
    %1127 = vmatprep.subr.bf16.mxu0 0
    %1128 = vmatpush1.bf16.xpose.msra.mxu0 %v1125
    %1129 = vmatprep.subr.bf16.mxu0 0
    %1130 = vmatpush1.bf16.xpose.msra.mxu0 0
    %1131 = vmatprep.subr.bf16.mxu0 0
    %1132 = vmatpush1.bf16.xpose.msra.mxu0 0
    %1133 = vmatprep.subr.bf16.mxu0 0
    %1134 = vmatpush1.bf16.xpose.msra.mxu0 0
    %1135 = vmatprep.subr.bf16.mxu0 0
    %1136 = vmatpush1.bf16.xpose.msra.mxu0 0
    %1137 = vmatprep.subr.bf16.mxu0 0
    %1138 = vmatpush1.bf16.xpose.msra.mxu0 0
    %1139 = vmatprep.subr.bf16.mxu0 0
    %1140 = vmatpush1.bf16.xpose.msra.mxu0 0
    %1141 = vmatprep.subr.bf16.mxu0 0
    %1142 = vmatpush1.bf16.xpose.msra.mxu0 0
    %1143 = vmatprep.subr.bf16.mxu0 0
    %1144 = vmatpush1.bf16.xpose.msra.mxu0 0
    %1145 = vmatprep.subr.bf16.mxu0 0
    %1146 = vmatpush1.bf16.xpose.msra.mxu0 0
    %1147 = vmatprep.subr.bf16.mxu0 0
    %1148 = vmatpush1.bf16.xpose.msra.mxu0 0
    %1149 = vmatprep.subr.bf16.mxu0 0
    %1150 = vmatpush1.bf16.xpose.msra.mxu0 0
    %1151 = vmatprep.subr.bf16.mxu0 0
    %1152 = vmatpush1.bf16.xpose.msra.mxu0 0
    %1153 = vmatprep.subr.bf16.mxu0 0
    %1154 = vmatpush1.bf16.xpose.msra.mxu0 0
    %1155 = vmatprep.subr.bf16.mxu0 0
    %1156 = vmatpush1.bf16.xpose.msra.mxu0 0
    %1157 = vmatprep.subr.bf16.mxu0 0
    %1158 = vmatpush1.bf16.xpose.msra.mxu0 0
    %1159 = vmatprep.mubr.bf16.mxu0 0
    %1160 = vmatmul.mubr.bf16.gmra.mrb[0].mxu0 %v1122
    %v1161 = vpop.f32.mrb[0].mxu0
    %v1162 = vadd.f32 0.0, %v1161
    %v1163 = vpop.f32.mrb[0].mxu0
    %v1164 = vpop.f32.mrb[0].mxu0
    %v1165 = vpop.f32.mrb[0].mxu0
    %1166 = vdwg.mxu0
    %v1167 = vmul.f32 %v1162, 0.35355338
    %v1168 = vadd.f32 %v1167, %v157
    %v1169 = vsel %vm162, %v1168, -inf
    %1170 = vmax.xlane.f32.xlu0 %v1169
    %v1171 = vpop.xlane.xlu0 %1170
    %v1172 = vsub.f32 %v1168, %v1171
    %v1173 = vmul.f32 %v1172, 1.442695
    %v1174 = vpow.pop %v1173
    %v1175 = vsel %vm162, %v1174, 0.0
    %1176 = vadd.xlane.f32.xlu0 %v1175
    %v1177 = vpop.xlane.xlu0 %1176
    %v1178 = vrcp.pop %v1177
    %v1179 = vmul.f32 %v1174, %v1178
    %v1180 = vpack.c.bf16 %v1179, %v1179
    %1181 = vrot.lane.b32.xlu0 %v805, 48
    %v1182 = vpop.permute.xlu0 %1181
    %v1184 = vsel %vm162, %v1180, 0
    %v1187 = vsel %vm228, %v1182, 0
    %1189 = vmatprep.subr.bf16.mxu0 0
    %1190 = vmatpush1.bf16.msra.mxu0 %v1187
    %1191 = vmatprep.subr.bf16.mxu0 0
    %1192 = vmatpush1.bf16.msra.mxu0 0
    %1193 = vmatprep.subr.bf16.mxu0 0
    %1194 = vmatpush1.bf16.msra.mxu0 0
    %1195 = vmatprep.subr.bf16.mxu0 0
    %1196 = vmatpush1.bf16.msra.mxu0 0
    %1197 = vmatprep.subr.bf16.mxu0 0
    %1198 = vmatpush1.bf16.msra.mxu0 0
    %1199 = vmatprep.subr.bf16.mxu0 0
    %1200 = vmatpush1.bf16.msra.mxu0 0
    %1201 = vmatprep.subr.bf16.mxu0 0
    %1202 = vmatpush1.bf16.msra.mxu0 0
    %1203 = vmatprep.subr.bf16.mxu0 0
    %1204 = vmatpush1.bf16.msra.mxu0 0
    %1205 = vmatprep.subr.bf16.mxu0 0
    %1206 = vmatpush1.bf16.msra.mxu0 0
    %1207 = vmatprep.subr.bf16.mxu0 0
    %1208 = vmatpush1.bf16.msra.mxu0 0
    %1209 = vmatprep.subr.bf16.mxu0 0
    %1210 = vmatpush1.bf16.msra.mxu0 0
    %1211 = vmatprep.subr.bf16.mxu0 0
    %1212 = vmatpush1.bf16.msra.mxu0 0
    %1213 = vmatprep.subr.bf16.mxu0 0
    %1214 = vmatpush1.bf16.msra.mxu0 0
    %1215 = vmatprep.subr.bf16.mxu0 0
    %1216 = vmatpush1.bf16.msra.mxu0 0
    %1217 = vmatprep.subr.bf16.mxu0 0
    %1218 = vmatpush1.bf16.msra.mxu0 0
    %1219 = vmatprep.subr.bf16.mxu0 0
    %1220 = vmatpush1.bf16.msra.mxu0 0
    %1221 = vmatprep.mubr.bf16.mxu0 0
    %1222 = vmatmul.mubr.bf16.gmra.mrb[0].mxu0 %v1184
    %v1223 = vpop.f32.mrb[0].mxu0
    %v1224 = vadd.f32 0.0, %v1223
    %v1225 = vpop.f32.mrb[0].mxu0
    %v1226 = vpop.f32.mrb[0].mxu0
    %v1227 = vpop.f32.mrb[0].mxu0
    %1228 = vdwg.mxu0
    %v1229 = vpack.c.bf16 %v1224, %v1224
    %v1231 = vsel %vm162, %v1229, 0
    %1233 = vmatprep.subr.bf16.mxu0 0
    %1234 = vmatpush1.bf16.msra.mxu0 %v600
    %1235 = vmatprep.subr.bf16.mxu0 0
    %1236 = vmatpush1.bf16.msra.mxu0 0
    %1237 = vmatprep.subr.bf16.mxu0 0
    %1238 = vmatpush1.bf16.msra.mxu0 0
    %1239 = vmatprep.subr.bf16.mxu0 0
    %1240 = vmatpush1.bf16.msra.mxu0 0
    %1241 = vmatprep.subr.bf16.mxu0 0
    %1242 = vmatpush1.bf16.msra.mxu0 0
    %1243 = vmatprep.subr.bf16.mxu0 0
    %1244 = vmatpush1.bf16.msra.mxu0 0
    %1245 = vmatprep.subr.bf16.mxu0 0
    %1246 = vmatpush1.bf16.msra.mxu0 0
    %1247 = vmatprep.subr.bf16.mxu0 0
    %1248 = vmatpush1.bf16.msra.mxu0 0
    %1249 = vmatprep.subr.bf16.mxu0 0
    %1250 = vmatpush1.bf16.msra.mxu0 0
    %1251 = vmatprep.subr.bf16.mxu0 0
    %1252 = vmatpush1.bf16.msra.mxu0 0
    %1253 = vmatprep.subr.bf16.mxu0 0
    %1254 = vmatpush1.bf16.msra.mxu0 0
    %1255 = vmatprep.subr.bf16.mxu0 0
    %1256 = vmatpush1.bf16.msra.mxu0 0
    %1257 = vmatprep.subr.bf16.mxu0 0
    %1258 = vmatpush1.bf16.msra.mxu0 0
    %1259 = vmatprep.subr.bf16.mxu0 0
    %1260 = vmatpush1.bf16.msra.mxu0 0
    %1261 = vmatprep.subr.bf16.mxu0 0
    %1262 = vmatpush1.bf16.msra.mxu0 0
    %1263 = vmatprep.subr.bf16.mxu0 0
    %1264 = vmatpush1.bf16.msra.mxu0 0
    %1265 = vmatprep.mubr.bf16.mxu0 0
    %1266 = vmatmul.mubr.bf16.gmra.mrb[0].mxu0 %v1231
    %v1267 = vpop.f32.mrb[0].mxu0
    %v1268 = vadd.f32 0.0, %v1267
    %v1269 = vpop.f32.mrb[0].mxu0
    %v1270 = vpop.f32.mrb[0].mxu0
    %v1271 = vpop.f32.mrb[0].mxu0
    %1272 = vdwg.mxu0
    %v1273 = vadd.f32 %v1112, %v1268
    %1274 = vrot.lane.b32.xlu0 %v805, 104
    %v1275 = vpop.permute.xlu0 %1274
    %1276 = vrot.lane.b32.xlu0 %v805, 72
    %v1277 = vpop.permute.xlu0 %1276
    %v1279 = vsel %vm162, %v1275, 0
    %v1282 = vsel %vm162, %v1277, 0
    %1284 = vmatprep.subr.bf16.mxu0 0
    %1285 = vmatpush1.bf16.xpose.msra.mxu0 %v1282
    %1286 = vmatprep.subr.bf16.mxu0 0
    %1287 = vmatpush1.bf16.xpose.msra.mxu0 0
    %1288 = vmatprep.subr.bf16.mxu0 0
    %1289 = vmatpush1.bf16.xpose.msra.mxu0 0
    %1290 = vmatprep.subr.bf16.mxu0 0
    %1291 = vmatpush1.bf16.xpose.msra.mxu0 0
    %1292 = vmatprep.subr.bf16.mxu0 0
    %1293 = vmatpush1.bf16.xpose.msra.mxu0 0
    %1294 = vmatprep.subr.bf16.mxu0 0
    %1295 = vmatpush1.bf16.xpose.msra.mxu0 0
    %1296 = vmatprep.subr.bf16.mxu0 0
    %1297 = vmatpush1.bf16.xpose.msra.mxu0 0
    %1298 = vmatprep.subr.bf16.mxu0 0
    %1299 = vmatpush1.bf16.xpose.msra.mxu0 0
    %1300 = vmatprep.subr.bf16.mxu0 0
    %1301 = vmatpush1.bf16.xpose.msra.mxu0 0
    %1302 = vmatprep.subr.bf16.mxu0 0
    %1303 = vmatpush1.bf16.xpose.msra.mxu0 0
    %1304 = vmatprep.subr.bf16.mxu0 0
    %1305 = vmatpush1.bf16.xpose.msra.mxu0 0
    %1306 = vmatprep.subr.bf16.mxu0 0
    %1307 = vmatpush1.bf16.xpose.msra.mxu0 0
    %1308 = vmatprep.subr.bf16.mxu0 0
    %1309 = vmatpush1.bf16.xpose.msra.mxu0 0
    %1310 = vmatprep.subr.bf16.mxu0 0
    %1311 = vmatpush1.bf16.xpose.msra.mxu0 0
    %1312 = vmatprep.subr.bf16.mxu0 0
    %1313 = vmatpush1.bf16.xpose.msra.mxu0 0
    %1314 = vmatprep.subr.bf16.mxu0 0
    %1315 = vmatpush1.bf16.xpose.msra.mxu0 0
    %1316 = vmatprep.mubr.bf16.mxu0 0
    %1317 = vmatmul.mubr.bf16.gmra.mrb[0].mxu0 %v1279
    %v1318 = vpop.f32.mrb[0].mxu0
    %v1319 = vadd.f32 0.0, %v1318
    %v1320 = vpop.f32.mrb[0].mxu0
    %v1321 = vpop.f32.mrb[0].mxu0
    %v1322 = vpop.f32.mrb[0].mxu0
    %1323 = vdwg.mxu0
    %v1324 = vmul.f32 %v1319, 0.35355338
    %v1325 = vadd.f32 %v1324, %v157
    %v1326 = vsel %vm162, %v1325, -inf
    %1327 = vmax.xlane.f32.xlu0 %v1326
    %v1328 = vpop.xlane.xlu0 %1327
    %v1329 = vsub.f32 %v1325, %v1328
    %v1330 = vmul.f32 %v1329, 1.442695
    %v1331 = vpow.pop %v1330
    %v1332 = vsel %vm162, %v1331, 0.0
    %1333 = vadd.xlane.f32.xlu0 %v1332
    %v1334 = vpop.xlane.xlu0 %1333
    %v1335 = vrcp.pop %v1334
    %v1336 = vmul.f32 %v1331, %v1335
    %v1337 = vpack.c.bf16 %v1336, %v1336
    %1338 = vrot.lane.b32.xlu0 %v805, 40
    %v1339 = vpop.permute.xlu0 %1338
    %v1341 = vsel %vm162, %v1337, 0
    %v1344 = vsel %vm228, %v1339, 0
    %1346 = vmatprep.subr.bf16.mxu0 0
    %1347 = vmatpush1.bf16.msra.mxu0 %v1344
    %1348 = vmatprep.subr.bf16.mxu0 0
    %1349 = vmatpush1.bf16.msra.mxu0 0
    %1350 = vmatprep.subr.bf16.mxu0 0
    %1351 = vmatpush1.bf16.msra.mxu0 0
    %1352 = vmatprep.subr.bf16.mxu0 0
    %1353 = vmatpush1.bf16.msra.mxu0 0
    %1354 = vmatprep.subr.bf16.mxu0 0
    %1355 = vmatpush1.bf16.msra.mxu0 0
    %1356 = vmatprep.subr.bf16.mxu0 0
    %1357 = vmatpush1.bf16.msra.mxu0 0
    %1358 = vmatprep.subr.bf16.mxu0 0
    %1359 = vmatpush1.bf16.msra.mxu0 0
    %1360 = vmatprep.subr.bf16.mxu0 0
    %1361 = vmatpush1.bf16.msra.mxu0 0
    %1362 = vmatprep.subr.bf16.mxu0 0
    %1363 = vmatpush1.bf16.msra.mxu0 0
    %1364 = vmatprep.subr.bf16.mxu0 0
    %1365 = vmatpush1.bf16.msra.mxu0 0
    %1366 = vmatprep.subr.bf16.mxu0 0
    %1367 = vmatpush1.bf16.msra.mxu0 0
    %1368 = vmatprep.subr.bf16.mxu0 0
    %1369 = vmatpush1.bf16.msra.mxu0 0
    %1370 = vmatprep.subr.bf16.mxu0 0
    %1371 = vmatpush1.bf16.msra.mxu0 0
    %1372 = vmatprep.subr.bf16.mxu0 0
    %1373 = vmatpush1.bf16.msra.mxu0 0
    %1374 = vmatprep.subr.bf16.mxu0 0
    %1375 = vmatpush1.bf16.msra.mxu0 0
    %1376 = vmatprep.subr.bf16.mxu0 0
    %1377 = vmatpush1.bf16.msra.mxu0 0
    %1378 = vmatprep.mubr.bf16.mxu0 0
    %1379 = vmatmul.mubr.bf16.gmra.mrb[0].mxu0 %v1341
    %v1380 = vpop.f32.mrb[0].mxu0
    %v1381 = vadd.f32 0.0, %v1380
    %v1382 = vpop.f32.mrb[0].mxu0
    %v1383 = vpop.f32.mrb[0].mxu0
    %v1384 = vpop.f32.mrb[0].mxu0
    %1385 = vdwg.mxu0
    %v1386 = vpack.c.bf16 %v1381, %v1381
    %v1388 = vsel %vm162, %v1386, 0
    %1390 = vmatprep.subr.bf16.mxu0 0
    %1391 = vmatpush1.bf16.msra.mxu0 %v762
    %1392 = vmatprep.subr.bf16.mxu0 0
    %1393 = vmatpush1.bf16.msra.mxu0 0
    %1394 = vmatprep.subr.bf16.mxu0 0
    %1395 = vmatpush1.bf16.msra.mxu0 0
    %1396 = vmatprep.subr.bf16.mxu0 0
    %1397 = vmatpush1.bf16.msra.mxu0 0
    %1398 = vmatprep.subr.bf16.mxu0 0
    %1399 = vmatpush1.bf16.msra.mxu0 0
    %1400 = vmatprep.subr.bf16.mxu0 0
    %1401 = vmatpush1.bf16.msra.mxu0 0
    %1402 = vmatprep.subr.bf16.mxu0 0
    %1403 = vmatpush1.bf16.msra.mxu0 0
    %1404 = vmatprep.subr.bf16.mxu0 0
    %1405 = vmatpush1.bf16.msra.mxu0 0
    %1406 = vmatprep.subr.bf16.mxu0 0
    %1407 = vmatpush1.bf16.msra.mxu0 0
    %1408 = vmatprep.subr.bf16.mxu0 0
    %1409 = vmatpush1.bf16.msra.mxu0 0
    %1410 = vmatprep.subr.bf16.mxu0 0
    %1411 = vmatpush1.bf16.msra.mxu0 0
    %1412 = vmatprep.subr.bf16.mxu0 0
    %1413 = vmatpush1.bf16.msra.mxu0 0
    %1414 = vmatprep.subr.bf16.mxu0 0
    %1415 = vmatpush1.bf16.msra.mxu0 0
    %1416 = vmatprep.subr.bf16.mxu0 0
    %1417 = vmatpush1.bf16.msra.mxu0 0
    %1418 = vmatprep.subr.bf16.mxu0 0
    %1419 = vmatpush1.bf16.msra.mxu0 0
    %1420 = vmatprep.subr.bf16.mxu0 0
    %1421 = vmatpush1.bf16.msra.mxu0 0
    %1422 = vmatprep.mubr.bf16.mxu0 0
    %1423 = vmatmul.mubr.bf16.gmra.mrb[0].mxu0 %v1388
    %v1424 = vpop.f32.mrb[0].mxu0
    %v1425 = vadd.f32 0.0, %v1424
    %v1426 = vpop.f32.mrb[0].mxu0
    %v1427 = vpop.f32.mrb[0].mxu0
    %v1428 = vpop.f32.mrb[0].mxu0
    %1429 = vdwg.mxu0
    %v1430 = vadd.f32 %v1273, %v1425
    %v1431 = vld [vmem:[%s5] sm:$0x1]
    %v1433 = vlaneseq
    %v1434 = vshrl.u32 %v1433, 7
    %v1435 = vsub.s32 0, %v1434
    %v1436 = vrot.slane %v1431, %v1435
    %v1438 = vadd.f32 %v804, %v1436
    %v1439 = vadd.f32 %v1430, %v1436
    %v1440 = vadd.f32 %v1438, %v43
    %v1441 = vadd.f32 %v1439, %v44
    %v1442 = vld [vmem:[%s10] sm:$0x1]
    %v1443 = vld [vmem:[%s11] sm:$0x1]
    %v1444 = vsel %vm47, %v1440, 0.0
    %1445 = vadd.xlane.f32.xlu0 %v1444
    %v1446 = vpop.xlane.xlu0 %1445
    %v1447 = vsel %vm47, %v1441, 0.0
    %1448 = vadd.xlane.f32.xlu0 %v1447
    %v1449 = vpop.xlane.xlu0 %1448
    %v1450 = vmul.f32 %v1446, %v54
    %v1451 = vmul.f32 %v1449, %v54
    %v1452 = vsub.f32 %v1440, %v1450
    %v1453 = vsub.f32 %v1441, %v1451
    %v1454 = vmul.f32 %v1452, %v1452
    %v1455 = vmul.f32 %v1453, %v1453
    %v1456 = vsel %vm47, %v1454, 0.0
    %1457 = vadd.xlane.f32.xlu0 %v1456
    %v1458 = vpop.xlane.xlu0 %1457
    %v1459 = vsel %vm47, %v1455, 0.0
    %1460 = vadd.xlane.f32.xlu0 %v1459
    %v1461 = vpop.xlane.xlu0 %1460
    %v1462 = vmul.f32 %v1458, %v54
    %v1463 = vmul.f32 %v1461, %v54
    %v1464 = vadd.f32 %v1462, 1e-07
    %v1465 = vadd.f32 %v1463, 1e-07
    %v1466 = vrsqrt.pop %v1464
    %v1467 = vrsqrt.pop %v1465
    %v1468 = vmul.f32 %v1452, %v1466
    %v1469 = vmul.f32 %v1453, %v1467
    %v1471 = vlaneseq
    %v1472 = vshrl.u32 %v1471, 7
    %v1473 = vsub.s32 0, %v1472
    %v1474 = vrot.slane %v1443, %v1473
    %v1476 = vadd.f32 %v1468, %v1474
    %v1477 = vadd.f32 %v1469, %v1474
    %v1479 = vlaneseq
    %v1480 = vshrl.u32 %v1479, 7
    %v1481 = vsub.s32 0, %v1480
    %v1482 = vrot.slane %v1442, %v1481
    %v1484 = vmul.f32 %v1476, %v1482
    %v1485 = vmul.f32 %v1477, %v1482
    %v1486 = vpack.c.bf16 %v1485, %v1484
    %v1487 = vld [vmem:[%s6] sm:$0xf]
    %v1488 = vld [vmem:[%s6 + $0x4] sm:$0xf]
    %v1489 = vld [vmem:[%s6 + $0x8] sm:$0xf]
    %v1490 = vld [vmem:[%s6 + $0xc] sm:$0xf]
    %v1491 = vld [vmem:[%s7] sm:$0x1]
    %v1493 = vlaneseq
    %v1494 = vshrl.u32 %v1493, 7
    %v1495 = vsub.s32 0, %v1494
    %v1496 = vrot.slane %v1491, %v1495
    %v1502 = vunpack.c.l.b16 %v1487
    %v1503 = vunpack.c.l.b16 %v1488
    %v1504 = vunpack.c.l.b16 %v1489
    %v1505 = vunpack.c.l.b16 %v1490
    %v1506 = vpack.c.b16 %v1503, %v1502
    %v1507 = vpack.c.b16 %v1505, %v1504
    %v1511 = vsel %vm47, %v1486, 0
    %1513 = vmatprep.subr.bf16.mxu0 0
    %1514 = vmatpush1.bf16.msra.mxu0 %v1506
    %1515 = vmatprep.subr.bf16.mxu0 0
    %1516 = vmatpush1.bf16.msra.mxu0 %v1507
    %1517 = vmatprep.subr.bf16.mxu0 0
    %1518 = vmatpush1.bf16.msra.mxu0 0
    %1519 = vmatprep.subr.bf16.mxu0 0
    %1520 = vmatpush1.bf16.msra.mxu0 0
    %1521 = vmatprep.subr.bf16.mxu0 0
    %1522 = vmatpush1.bf16.msra.mxu0 0
    %1523 = vmatprep.subr.bf16.mxu0 0
    %1524 = vmatpush1.bf16.msra.mxu0 0
    %1525 = vmatprep.subr.bf16.mxu0 0
    %1526 = vmatpush1.bf16.msra.mxu0 0
    %1527 = vmatprep.subr.bf16.mxu0 0
    %1528 = vmatpush1.bf16.msra.mxu0 0
    %1529 = vmatprep.subr.bf16.mxu0 0
    %1530 = vmatpush1.bf16.msra.mxu0 0
    %1531 = vmatprep.subr.bf16.mxu0 0
    %1532 = vmatpush1.bf16.msra.mxu0 0
    %1533 = vmatprep.subr.bf16.mxu0 0
    %1534 = vmatpush1.bf16.msra.mxu0 0
    %1535 = vmatprep.subr.bf16.mxu0 0
    %1536 = vmatpush1.bf16.msra.mxu0 0
    %1537 = vmatprep.subr.bf16.mxu0 0
    %1538 = vmatpush1.bf16.msra.mxu0 0
    %1539 = vmatprep.subr.bf16.mxu0 0
    %1540 = vmatpush1.bf16.msra.mxu0 0
    %1541 = vmatprep.subr.bf16.mxu0 0
    %1542 = vmatpush1.bf16.msra.mxu0 0
    %1543 = vmatprep.subr.bf16.mxu0 0
    %1544 = vmatpush1.bf16.msra.mxu0 0
    %1545 = vmatprep.mubr.bf16.mxu0 0
    %1546 = vmatmul.mubr.bf16.gmra.mrb[0].mxu0 %v1511
    %v1547 = vpop.f32.mrb[0].mxu0
    %v1548 = vadd.f32 %v1496, %v1547
    %v1549 = vpop.f32.mrb[0].mxu0
    %v1550 = vpop.f32.mrb[0].mxu0
    %v1551 = vadd.f32 %v1496, %v1550
    %v1552 = vpop.f32.mrb[0].mxu0
    %1553 = vdwg.mxu0
    %v1554 = vmul.f32 %v1548, 0.5
    %v1555 = vmul.f32 %v1551, 0.5
    %v1556 = vmul.f32 %v1548, 0.044715
    %v1557 = vmul.f32 %v1551, 0.044715
    %v1558 = vmul.f32 %v1556, %v1548
    %v1559 = vmul.f32 %v1557, %v1551
    %v1560 = vmul.f32 %v1558, %v1548
    %v1561 = vmul.f32 %v1559, %v1551
    %v1562 = vadd.f32 %v1548, %v1560
    %v1563 = vadd.f32 %v1551, %v1561
    %v1564 = vmul.f32 %v1562, 0.7978846
    %v1565 = vmul.f32 %v1563, 0.7978846
    %v1566 = vtanh.pop %v1564
    %v1567 = vtanh.pop %v1565
    %v1568 = vadd.f32 %v1566, 1.0
    %v1569 = vadd.f32 %v1567, 1.0
    %v1570 = vmul.f32 %v1554, %v1568
    %v1571 = vmul.f32 %v1555, %v1569
    %v1572 = vpack.c.bf16 %v1571, %v1570
    %v1573 = vld [vmem:[%s8] sm:$0xf]
    %v1574 = vld [vmem:[%s8 + $0x4] sm:$0xf]
    %v1575 = vld [vmem:[%s8 + $0x8] sm:$0xf]
    %v1576 = vld [vmem:[%s8 + $0xc] sm:$0xf]
    %v1577 = vld [vmem:[%s8 + $0x10] sm:$0xf]
    %v1578 = vld [vmem:[%s8 + $0x14] sm:$0xf]
    %v1579 = vld [vmem:[%s8 + $0x18] sm:$0xf]
    %v1580 = vld [vmem:[%s8 + $0x1c] sm:$0xf]
    %v1581 = vld [vmem:[%s8 + $0x20] sm:$0xf]
    %v1582 = vld [vmem:[%s8 + $0x24] sm:$0xf]
    %v1583 = vld [vmem:[%s8 + $0x28] sm:$0xf]
    %v1584 = vld [vmem:[%s8 + $0x2c] sm:$0xf]
    %v1585 = vld [vmem:[%s8 + $0x30] sm:$0xf]
    %v1586 = vld [vmem:[%s8 + $0x34] sm:$0xf]
    %v1587 = vld [vmem:[%s8 + $0x38] sm:$0xf]
    %v1588 = vld [vmem:[%s8 + $0x3c] sm:$0xf]
    %v1589 = vld [vmem:[%s9] sm:$0x1]
    %v1591 = vlaneseq
    %v1592 = vshrl.u32 %v1591, 7
    %v1593 = vsub.s32 0, %v1592
    %v1594 = vrot.slane %v1589, %v1593
    %v1612 = vunpack.c.l.b16 %v1573
    %v1613 = vunpack.c.l.b16 %v1574
    %v1614 = vunpack.c.l.b16 %v1575
    %v1615 = vunpack.c.l.b16 %v1576
    %v1616 = vunpack.c.l.b16 %v1577
    %v1617 = vunpack.c.l.b16 %v1578
    %v1618 = vunpack.c.l.b16 %v1579
    %v1619 = vunpack.c.l.b16 %v1580
    %v1620 = vunpack.c.l.b16 %v1581
    %v1621 = vunpack.c.l.b16 %v1582
    %v1622 = vunpack.c.l.b16 %v1583
    %v1623 = vunpack.c.l.b16 %v1584
    %v1624 = vunpack.c.l.b16 %v1585
    %v1625 = vunpack.c.l.b16 %v1586
    %v1626 = vunpack.c.l.b16 %v1587
    %v1627 = vunpack.c.l.b16 %v1588
    %v1628 = vpack.c.b16 %v1613, %v1612
    %v1629 = vpack.c.b16 %v1615, %v1614
    %v1630 = vpack.c.b16 %v1617, %v1616
    %v1631 = vpack.c.b16 %v1619, %v1618
    %v1632 = vpack.c.b16 %v1621, %v1620
    %v1633 = vpack.c.b16 %v1623, %v1622
    %v1634 = vpack.c.b16 %v1625, %v1624
    %v1635 = vpack.c.b16 %v1627, %v1626
    %1644 = vmatprep.subr.bf16.mxu0 0
    %1645 = vmatpush1.bf16.msra.mxu0 %v1628
    %1646 = vmatprep.subr.bf16.mxu0 0
    %1647 = vmatpush1.bf16.msra.mxu0 %v1629
    %1648 = vmatprep.subr.bf16.mxu0 0
    %1649 = vmatpush1.bf16.msra.mxu0 %v1630
    %1650 = vmatprep.subr.bf16.mxu0 0
    %1651 = vmatpush1.bf16.msra.mxu0 %v1631
    %1652 = vmatprep.subr.bf16.mxu0 0
    %1653 = vmatpush1.bf16.msra.mxu0 %v1632
    %1654 = vmatprep.subr.bf16.mxu0 0
    %1655 = vmatpush1.bf16.msra.mxu0 %v1633
    %1656 = vmatprep.subr.bf16.mxu0 0
    %1657 = vmatpush1.bf16.msra.mxu0 %v1634
    %1658 = vmatprep.subr.bf16.mxu0 0
    %1659 = vmatpush1.bf16.msra.mxu0 %v1635
    %1660 = vmatprep.subr.bf16.mxu0 0
    %1661 = vmatpush1.bf16.msra.mxu0 0
    %1662 = vmatprep.subr.bf16.mxu0 0
    %1663 = vmatpush1.bf16.msra.mxu0 0
    %1664 = vmatprep.subr.bf16.mxu0 0
    %1665 = vmatpush1.bf16.msra.mxu0 0
    %1666 = vmatprep.subr.bf16.mxu0 0
    %1667 = vmatpush1.bf16.msra.mxu0 0
    %1668 = vmatprep.subr.bf16.mxu0 0
    %1669 = vmatpush1.bf16.msra.mxu0 0
    %1670 = vmatprep.subr.bf16.mxu0 0
    %1671 = vmatpush1.bf16.msra.mxu0 0
    %1672 = vmatprep.subr.bf16.mxu0 0
    %1673 = vmatpush1.bf16.msra.mxu0 0
    %1674 = vmatprep.subr.bf16.mxu0 0
    %1675 = vmatpush1.bf16.msra.mxu0 0
    %1676 = vmatprep.mubr.bf16.mxu0 0
    %1677 = vmatmul.mubr.bf16.gmra.mrb[0].mxu0 %v1572
    %v1678 = vpop.f32.mrb[0].mxu0
    %v1679 = vadd.f32 %v1594, %v1678
    %v1680 = vpop.f32.mrb[0].mxu0
    %v1681 = vpop.f32.mrb[0].mxu0
    %v1682 = vadd.f32 %v1594, %v1681
    %v1683 = vpop.f32.mrb[0].mxu0
    %1684 = vdwg.mxu0
    %v1685 = vadd.f32 %v1679, %v1440
    %v1686 = vadd.f32 %v1682, %v1441
    %1687 = vst.msk [vmem:[#allocation2] sm:$0xff] %vm47, %v1685
    %1688 = vst.msk [vmem:[#allocation2 + $0x8] sm:$0xff] %vm47, %v1686
    // Predicated region
    $region50: #{tpu_custom_call.1} parent=1 // pred_check
      _
    $region51: #{tpu_custom_call.1} parent=1 // pred_check_branch
      %1690 = sbr.rel (0) target = $region53
    $region52: #{tpu_custom_call.1} parent=1 // pred_region
      %s1692 = ssub.s32 256, 256
      %1693 = vsyncadd [#allocation3], %s1692
      %s1694 = sshll.u32 [#allocation2], 4
      %s1695 = int_to_ptr.vmem [resolvable:$true] %s1694
      %1700 = dma.vmem_to_hbm [thread:$0]  %s1695, 256, %s12, [#allocation3], 128, 128, 8
    $region53: #{tpu_custom_call.1} parent=1 // pred_fallthru
      _
    // Predicated region
    $region54: #{tpu_custom_call.1} parent=1 // pred_check
      _
    $region55: #{tpu_custom_call.1} parent=1 // pred_check_branch
      %1702 = sbr.rel (0) target = $region57
    $region56: #{tpu_custom_call.1} parent=1 // pred_region
      %1703 = dma.done [#allocation3], 256
    $region57: #{tpu_custom_call.1} parent=1 // pred_fallthru
      _
    %1704 = vsyncpa [#allocation3], 1

</llo_original>
